<compile_context>
chip_gen: v7x
topology: tpu7x:2x2x1
jax: 0.10.0
libtpu: 0.0.40
codegen_flags: <defaults>
</compile_context>

<pallas_src>
import functools

import jax
import jax.numpy as jnp
import numpy as np
from jax.experimental import pallas as pl
from jax.experimental.pallas import tpu as pltpu


# ----------------------------------------------------------------------------
# Fused stage kernel (one grid step = one batch element)
# ----------------------------------------------------------------------------
def _stage_kernel(d_ref, h_ref, a0_ref, a1_ref, eps_ref,
                  wp_ref, bp_ref, wm_ref, bm_ref, wq_ref, bq_ref,
                  wj_ref, bj_ref, w0_ref, b0_ref, w1_ref, b1_ref,
                  h1_ref, h2_ref, z_ref, kl_ref, *, z_dim):
    f32 = jnp.float32
    d = d_ref[0]            # (C, HW)  top-down input io.d
    h = h_ref[0]            # (C, HW)  posterior.h (bottom-up)
    a0 = a0_ref[0]          # (C, HW)  aux skip 0
    a1 = a1_ref[0]          # (C, HW)  aux skip 1
    eps = eps_ref[0]        # (Z, HW)  reparameterization noise

    # 1. prior params: fused [mu_p; logvar_p] head, sample=False (posterior given)
    pp = jnp.dot(wp_ref[...], d, preferred_element_type=f32) + bp_ref[...]
    mu_p = pp[:z_dim]
    lv_p = pp[z_dim:]

    # 2. merge(h, aux=d): residual conv1x1 block, main|aux weights fused
    hm = jnp.dot(wm_ref[...], jnp.concatenate([h, d], axis=0),
                 preferred_element_type=f32) + bm_ref[...]
    hm = jnp.maximum(hm, 0.0) + h

    # 3. posterior params + reparameterized sample (fused [mu_q; logvar_q] head)
    qp = jnp.dot(wq_ref[...], hm, preferred_element_type=f32) + bq_ref[...]
    mu_q = qp[:z_dim]
    lv_q = qp[z_dim:]
    sigma_q = jnp.exp(0.5 * lv_q)          # single EUP exp, reused below
    z = mu_q + sigma_q * eps

    # 4. KL = sum_{z,hw} [log q(z) - log p(z)]  (log 2pi cancels;
    #    (z - mu_q)^2 * exp(-lv_q) == eps^2, reusing sigma instead of a 2nd exp)
    dp = z - mu_p
    kl_elem = 0.5 * ((lv_p - lv_q) + dp * dp * jnp.exp(-lv_p) - eps * eps)
    kl = jnp.sum(jnp.sum(kl_elem, axis=1, keepdims=True), axis=0, keepdims=True)
    kl_ref[0] = kl                          # (1, 1) scalar per batch element

    # 5. p_projection (AsFeatureMap): z -> C feature map
    zc = jnp.dot(wj_ref[...], z, preferred_element_type=f32) + bj_ref[...]

    # 6. p_deterministic: two conv1x1 blocks with aux skip injections
    h1 = jnp.maximum(
        jnp.dot(w0_ref[...], jnp.concatenate([zc, a0], axis=0),
                preferred_element_type=f32) + b0_ref[...], 0.0)
    h2 = jnp.maximum(
        jnp.dot(w1_ref[...], jnp.concatenate([h1, a1], axis=0),
                preferred_element_type=f32) + b1_ref[...], 0.0) + h1

    h1_ref[0] = h1
    h2_ref[0] = h2
    z_ref[0] = z


# ----------------------------------------------------------------------------
# Parameters (pre-packed in the fused (C_out, C_in) / [mu;lv] / [main|aux] layout)
# ----------------------------------------------------------------------------
def init_params(key, c=32, z_dim=8, scale=0.1):
    ks = jax.random.split(key, 10)

    def n(i, shape):
        return scale * jax.random.normal(ks[i], shape, jnp.float32)

    return {
        # Gaussian heads: weights (2Z, C) = [mu; logvar], biases (2Z, 1)
        "wp": n(0, (2 * z_dim, c)), "bp": n(1, (2 * z_dim, 1)),   # prior (from d)
        "wq": n(2, (2 * z_dim, c)), "bq": n(3, (2 * z_dim, 1)),   # posterior (from h_m)
        # merge block (residual, aux = d): weight (C, 2C) = [W_main | W_aux]
        "wm": n(4, (c, 2 * c)), "bm": n(5, (c, 1)),
        # p_projection (AsFeatureMap): z -> C
        "wj": n(6, (c, z_dim)), "bj": n(7, (c, 1)),
        # p_deterministic: two blocks with aux skips, weights (C, 2C)
        "w0": n(8, (c, 2 * c)), "b0": jnp.zeros((c, 1), jnp.float32),
        "w1": n(9, (c, 2 * c)), "b1": jnp.zeros((c, 1), jnp.float32),
    }


# ----------------------------------------------------------------------------
# LvaeStage.forward (posterior available, decode_from_p=False)
# ----------------------------------------------------------------------------
def lvae_stage_forward(params, d_nchw, h_nchw, aux_nchw_list, eps_q_nchw):
    """Returns (d_out, skips, kl_per_batch, z) mirroring LvaeStage.forward outputs."""
    B, C, H, W = d_nchw.shape
    HW = H * W
    Z = eps_q_nchw.shape[1]
    # (sublane, lane) alignment of the channel / spatial dims
    assert HW % 128 == 0 and C % 8 == 0 and Z % 8 == 0

    # channel-sublane / spatial-lane layout: pure reshapes, no NCHW<->NHWC transposes
    d = d_nchw.reshape(B, C, HW)
    h = h_nchw.reshape(B, C, HW)
    a0 = aux_nchw_list[0].reshape(B, C, HW)
    a1 = aux_nchw_list[1].reshape(B, C, HW)
    eps = eps_q_nchw.reshape(B, Z, HW)

    act_spec = pl.BlockSpec((1, C, HW), lambda b: (b, 0, 0))
    lat_spec = pl.BlockSpec((1, Z, HW), lambda b: (b, 0, 0))
    kl_spec = pl.BlockSpec((1, 1, 1), lambda b: (b, 0, 0))

    def w_spec(arr):
        # Full-array block, block index constant across the grid -> weights stay
        # resident in VMEM (no per-step re-DMA).
        return pl.BlockSpec(arr.shape, lambda b: (0, 0))

    weights = [params[k] for k in
               ("wp", "bp", "wm", "bm", "wq", "bq", "wj", "bj",
                "w0", "b0", "w1", "b1")]

    h1, h2, z, kl = pl.pallas_call(
        functools.partial(_stage_kernel, z_dim=Z),
        out_shape=(jax.ShapeDtypeStruct((B, C, HW), jnp.float32),   # skip 0 (h1)
                   jax.ShapeDtypeStruct((B, C, HW), jnp.float32),   # d_out / skip 1 (h2)
                   jax.ShapeDtypeStruct((B, Z, HW), jnp.float32),   # z
                   jax.ShapeDtypeStruct((B, 1, 1), jnp.float32)),   # kl per batch
        grid=(B,),
        in_specs=[act_spec, act_spec, act_spec, act_spec, lat_spec]
                 + [w_spec(w) for w in weights],
        out_specs=(act_spec, act_spec, lat_spec, kl_spec),
        compiler_params=pltpu.CompilerParams(
            dimension_semantics=("parallel",)),
    )(d, h, a0, a1, eps, *weights)

    d_out = h2.reshape(B, C, H, W)
    skips = [h1.reshape(B, C, H, W), d_out]
    return d_out, skips, kl.reshape(B), z.reshape(B, Z, H, W)


# ----------------------------------------------------------------------------
# Pure-JAX reference of the same forward (for correctness verification)
# ----------------------------------------------------------------------------
def lvae_stage_reference(params, d_nchw, h_nchw, aux_nchw_list, eps_q_nchw):
    B, C, H, W = d_nchw.shape
    HW = H * W
    Z = eps_q_nchw.shape[1]
    d = d_nchw.reshape(B, C, HW)
    h = h_nchw.reshape(B, C, HW)
    a0 = aux_nchw_list[0].reshape(B, C, HW)
    a1 = aux_nchw_list[1].reshape(B, C, HW)
    eps = eps_q_nchw.reshape(B, Z, HW)

    def mm(w, x):
        return jnp.einsum("oc,bcs->bos", w, x,
                          preferred_element_type=jnp.float32)

    pp = mm(params["wp"], d) + params["bp"][None]
    mu_p, lv_p = pp[:, :Z], pp[:, Z:]
    hm = mm(params["wm"], jnp.concatenate([h, d], axis=1)) + params["bm"][None]
    hm = jnp.maximum(hm, 0.0) + h
    qp = mm(params["wq"], hm) + params["bq"][None]
    mu_q, lv_q = qp[:, :Z], qp[:, Z:]
    z = mu_q + jnp.exp(0.5 * lv_q) * eps
    dp = z - mu_p
    kl_elem = 0.5 * ((lv_p - lv_q) + dp * dp * jnp.exp(-lv_p) - eps * eps)
    kl = jnp.sum(kl_elem, axis=(1, 2))
    zc = mm(params["wj"], z) + params["bj"][None]
    h1 = jnp.maximum(mm(params["w0"], jnp.concatenate([zc, a0], axis=1))
                     + params["b0"][None], 0.0)
    h2 = jnp.maximum(mm(params["w1"], jnp.concatenate([h1, a1], axis=1))
                     + params["b1"][None], 0.0) + h1
    d_out = h2.reshape(B, C, H, W)
    return d_out, [h1.reshape(B, C, H, W), d_out], kl, z.reshape(B, Z, H, W)


if __name__ == "__main__":
    B, C, H, W, Z = 2, 32, 16, 16, 8
    key = jax.random.PRNGKey(0)
    k_d, k_h, k_a0, k_a1, k_eps, k_par = jax.random.split(key, 6)

    d_in = jax.random.normal(k_d, (B, C, H, W), jnp.float32)       # io.d (top-down)
    h_in = jax.random.normal(k_h, (B, C, H, W), jnp.float32)       # posterior.h (bottom-up)
    aux = [jax.random.normal(k_a0, (B, C, H, W), jnp.float32),     # io.aux skips
           jax.random.normal(k_a1, (B, C, H, W), jnp.float32)]
    eps = jax.random.normal(k_eps, (B, Z, H, W), jnp.float32)      # reparameterization noise

    params = init_params(k_par, c=C, z_dim=Z)

    fwd = jax.jit(lvae_stage_forward)
    d_out, skips, kl, z = fwd(params, d_in, h_in, aux, eps)
    jax.block_until_ready((d_out, skips, kl, z))

    assert d_out.shape == (B, C, H, W)
    assert skips[0].shape == (B, C, H, W) and skips[1].shape == (B, C, H, W)
    assert kl.shape == (B,)
    assert z.shape == (B, Z, H, W)
    assert all(bool(jnp.isfinite(t).all()) for t in (d_out, kl, z))

    # Verify against the pure-JAX reference (loose tolerance: MXU matmul passes)
    r_d, r_skips, r_kl, r_z = jax.jit(lvae_stage_reference)(
        params, d_in, h_in, aux, eps)
    np.testing.assert_allclose(np.asarray(d_out), np.asarray(r_d),
                               rtol=2e-2, atol=2e-2)
    np.testing.assert_allclose(np.asarray(skips[0]), np.asarray(r_skips[0]),
                               rtol=2e-2, atol=2e-2)
    np.testing.assert_allclose(np.asarray(z), np.asarray(r_z),
                               rtol=2e-2, atol=2e-2)
    np.testing.assert_allclose(np.asarray(kl), np.asarray(r_kl),
                               rtol=2e-2, atol=2e-2)

    print("KERNEL_OK")
</pallas_src>

<mosaic_0001>
module attributes {stable_mosaic.version = 11 : i64} {
  func.func @_stage_kernel(%arg0: i32, %arg1: memref<1x32x256xf32, #tpu.memory_space<vmem>>, %arg2: memref<1x32x256xf32, #tpu.memory_space<vmem>>, %arg3: memref<1x32x256xf32, #tpu.memory_space<vmem>>, %arg4: memref<1x32x256xf32, #tpu.memory_space<vmem>>, %arg5: memref<1x8x256xf32, #tpu.memory_space<vmem>>, %arg6: memref<16x32xf32, #tpu.memory_space<vmem>>, %arg7: memref<16x1xf32, #tpu.memory_space<vmem>>, %arg8: memref<32x64xf32, #tpu.memory_space<vmem>>, %arg9: memref<32x1xf32, #tpu.memory_space<vmem>>, %arg10: memref<16x32xf32, #tpu.memory_space<vmem>>, %arg11: memref<16x1xf32, #tpu.memory_space<vmem>>, %arg12: memref<32x8xf32, #tpu.memory_space<vmem>>, %arg13: memref<32x1xf32, #tpu.memory_space<vmem>>, %arg14: memref<32x64xf32, #tpu.memory_space<vmem>>, %arg15: memref<32x1xf32, #tpu.memory_space<vmem>>, %arg16: memref<32x64xf32, #tpu.memory_space<vmem>>, %arg17: memref<32x1xf32, #tpu.memory_space<vmem>>, %arg18: memref<1x32x256xf32, #tpu.memory_space<vmem>>, %arg19: memref<1x32x256xf32, #tpu.memory_space<vmem>>, %arg20: memref<1x8x256xf32, #tpu.memory_space<vmem>>, %arg21: memref<1x1x1xf32, #tpu.memory_space<vmem>>) attributes {dimension_semantics = [#tpu.dimension_semantics<parallel>], iteration_bounds = array<i64: 2>, scalar_prefetch = 0 : i64, scratch_operands = 0 : i64, tpu.core_type = #tpu.core_type<tc>, window_params = [{transform_indices = @transform_0, window_bounds = array<i64: 1, 32, 256>}, {transform_indices = @transform_1, window_bounds = array<i64: 1, 32, 256>}, {transform_indices = @transform_2, window_bounds = array<i64: 1, 32, 256>}, {transform_indices = @transform_3, window_bounds = array<i64: 1, 32, 256>}, {transform_indices = @transform_4, window_bounds = array<i64: 1, 8, 256>}, {pipeline_mode = #tpu.pipeline_mode<synchronous>, transform_indices = @transform_5, window_bounds = array<i64: 16, 32>}, {pipeline_mode = #tpu.pipeline_mode<synchronous>, transform_indices = @transform_6, window_bounds = array<i64: 16, 1>}, {pipeline_mode = #tpu.pipeline_mode<synchronous>, transform_indices = @transform_7, window_bounds = array<i64: 32, 64>}, {pipeline_mode = #tpu.pipeline_mode<synchronous>, transform_indices = @transform_8, window_bounds = array<i64: 32, 1>}, {pipeline_mode = #tpu.pipeline_mode<synchronous>, transform_indices = @transform_9, window_bounds = array<i64: 16, 32>}, {pipeline_mode = #tpu.pipeline_mode<synchronous>, transform_indices = @transform_10, window_bounds = array<i64: 16, 1>}, {pipeline_mode = #tpu.pipeline_mode<synchronous>, transform_indices = @transform_11, window_bounds = array<i64: 32, 8>}, {pipeline_mode = #tpu.pipeline_mode<synchronous>, transform_indices = @transform_12, window_bounds = array<i64: 32, 1>}, {pipeline_mode = #tpu.pipeline_mode<synchronous>, transform_indices = @transform_13, window_bounds = array<i64: 32, 64>}, {pipeline_mode = #tpu.pipeline_mode<synchronous>, transform_indices = @transform_14, window_bounds = array<i64: 32, 1>}, {pipeline_mode = #tpu.pipeline_mode<synchronous>, transform_indices = @transform_15, window_bounds = array<i64: 32, 64>}, {pipeline_mode = #tpu.pipeline_mode<synchronous>, transform_indices = @transform_16, window_bounds = array<i64: 32, 1>}, {transform_indices = @transform_17, window_bounds = array<i64: 1, 32, 256>}, {transform_indices = @transform_18, window_bounds = array<i64: 1, 32, 256>}, {transform_indices = @transform_19, window_bounds = array<i64: 1, 8, 256>}, {transform_indices = @transform_20, window_bounds = array<i64: 1, 1, 1>}]} {
    %c0 = arith.constant 0 : index
    %c0_0 = arith.constant 0 : index
    %c0_1 = arith.constant 0 : index
    %0 = vector.load %arg1[%c0, %c0_0, %c0_1] : memref<1x32x256xf32, #tpu.memory_space<vmem>>, vector<1x32x256xf32>
    %1 = vector.shape_cast %0 : vector<1x32x256xf32> to vector<32x256xf32>
    %c0_2 = arith.constant 0 : index
    %c0_3 = arith.constant 0 : index
    %c0_4 = arith.constant 0 : index
    %2 = vector.load %arg2[%c0_2, %c0_3, %c0_4] : memref<1x32x256xf32, #tpu.memory_space<vmem>>, vector<1x32x256xf32>
    %3 = vector.shape_cast %2 : vector<1x32x256xf32> to vector<32x256xf32>
    %c0_5 = arith.constant 0 : index
    %c0_6 = arith.constant 0 : index
    %c0_7 = arith.constant 0 : index
    %4 = vector.load %arg3[%c0_5, %c0_6, %c0_7] : memref<1x32x256xf32, #tpu.memory_space<vmem>>, vector<1x32x256xf32>
    %5 = vector.shape_cast %4 : vector<1x32x256xf32> to vector<32x256xf32>
    %c0_8 = arith.constant 0 : index
    %c0_9 = arith.constant 0 : index
    %c0_10 = arith.constant 0 : index
    %6 = vector.load %arg4[%c0_8, %c0_9, %c0_10] : memref<1x32x256xf32, #tpu.memory_space<vmem>>, vector<1x32x256xf32>
    %7 = vector.shape_cast %6 : vector<1x32x256xf32> to vector<32x256xf32>
    %c0_11 = arith.constant 0 : index
    %c0_12 = arith.constant 0 : index
    %c0_13 = arith.constant 0 : index
    %8 = vector.load %arg5[%c0_11, %c0_12, %c0_13] : memref<1x8x256xf32, #tpu.memory_space<vmem>>, vector<1x8x256xf32>
    %9 = vector.shape_cast %8 : vector<1x8x256xf32> to vector<8x256xf32>
    %c0_14 = arith.constant 0 : index
    %c0_15 = arith.constant 0 : index
    %10 = vector.load %arg6[%c0_14, %c0_15] : memref<16x32xf32, #tpu.memory_space<vmem>>, vector<16x32xf32>
    %cst = arith.constant dense<0.000000e+00> : vector<16x256xf32>
    %11 = tpu.matmul %10, %1, %cst {dimension_numbers = #tpu.dot_dimension_numbers<[1], [0], [0], [1], [0, 0, 1, 1], [], []>} : vector<16x32xf32>, vector<32x256xf32>, vector<16x256xf32> -> vector<16x256xf32>
    %c0_16 = arith.constant 0 : index
    %c0_17 = arith.constant 0 : index
    %12 = vector.load %arg7[%c0_16, %c0_17] : memref<16x1xf32, #tpu.memory_space<vmem>>, vector<16x1xf32>
    %13 = vector.broadcast %12 : vector<16x1xf32> to vector<16x256xf32>
    %14 = arith.addf %11, %13 : vector<16x256xf32>
    %15 = vector.extract_strided_slice %14 {offsets = [0, 0], sizes = [8, 256], strides = [1, 1]} : vector<16x256xf32> to vector<8x256xf32>
    %16 = vector.extract_strided_slice %14 {offsets = [8, 0], sizes = [8, 256], strides = [1, 1]} : vector<16x256xf32> to vector<8x256xf32>
    %c0_18 = arith.constant 0 : index
    %c0_19 = arith.constant 0 : index
    %17 = vector.load %arg8[%c0_18, %c0_19] : memref<32x64xf32, #tpu.memory_space<vmem>>, vector<32x64xf32>
    %18 = tpu.concatenate %3, %1 in 0 : vector<32x256xf32>, vector<32x256xf32> -> vector<64x256xf32>
    %cst_20 = arith.constant dense<0.000000e+00> : vector<32x256xf32>
    %19 = tpu.matmul %17, %18, %cst_20 {dimension_numbers = #tpu.dot_dimension_numbers<[1], [0], [0], [1], [0, 0, 1, 1], [], []>} : vector<32x64xf32>, vector<64x256xf32>, vector<32x256xf32> -> vector<32x256xf32>
    %c0_21 = arith.constant 0 : index
    %c0_22 = arith.constant 0 : index
    %20 = vector.load %arg9[%c0_21, %c0_22] : memref<32x1xf32, #tpu.memory_space<vmem>>, vector<32x1xf32>
    %21 = vector.broadcast %20 : vector<32x1xf32> to vector<32x256xf32>
    %22 = arith.addf %19, %21 : vector<32x256xf32>
    %cst_23 = arith.constant 0.000000e+00 : f32
    %23 = vector.broadcast %cst_23 : f32 to vector<32x256xf32>
    %24 = arith.maximumf %22, %23 : vector<32x256xf32>
    %25 = arith.addf %24, %3 : vector<32x256xf32>
    %c0_24 = arith.constant 0 : index
    %c0_25 = arith.constant 0 : index
    %26 = vector.load %arg10[%c0_24, %c0_25] : memref<16x32xf32, #tpu.memory_space<vmem>>, vector<16x32xf32>
    %cst_26 = arith.constant dense<0.000000e+00> : vector<16x256xf32>
    %27 = tpu.matmul %26, %25, %cst_26 {dimension_numbers = #tpu.dot_dimension_numbers<[1], [0], [0], [1], [0, 0, 1, 1], [], []>} : vector<16x32xf32>, vector<32x256xf32>, vector<16x256xf32> -> vector<16x256xf32>
    %c0_27 = arith.constant 0 : index
    %c0_28 = arith.constant 0 : index
    %28 = vector.load %arg11[%c0_27, %c0_28] : memref<16x1xf32, #tpu.memory_space<vmem>>, vector<16x1xf32>
    %29 = vector.broadcast %28 : vector<16x1xf32> to vector<16x256xf32>
    %30 = arith.addf %27, %29 : vector<16x256xf32>
    %31 = vector.extract_strided_slice %30 {offsets = [0, 0], sizes = [8, 256], strides = [1, 1]} : vector<16x256xf32> to vector<8x256xf32>
    %32 = vector.extract_strided_slice %30 {offsets = [8, 0], sizes = [8, 256], strides = [1, 1]} : vector<16x256xf32> to vector<8x256xf32>
    %cst_29 = arith.constant 5.000000e-01 : f32
    %33 = vector.broadcast %cst_29 : f32 to vector<8x256xf32>
    %34 = arith.mulf %33, %32 : vector<8x256xf32>
    %35 = math.exp %34 : vector<8x256xf32>
    %36 = arith.mulf %35, %9 : vector<8x256xf32>
    %37 = arith.addf %31, %36 : vector<8x256xf32>
    %38 = arith.subf %37, %15 : vector<8x256xf32>
    %39 = arith.subf %16, %32 : vector<8x256xf32>
    %40 = arith.mulf %38, %38 : vector<8x256xf32>
    %cst_30 = arith.constant 0.000000e+00 : f32
    %41 = vector.broadcast %cst_30 : f32 to vector<8x256xf32>
    %42 = arith.subf %41, %16 : vector<8x256xf32>
    %43 = math.exp %42 : vector<8x256xf32>
    %44 = arith.mulf %40, %43 : vector<8x256xf32>
    %45 = arith.addf %39, %44 : vector<8x256xf32>
    %46 = arith.mulf %9, %9 : vector<8x256xf32>
    %47 = arith.subf %45, %46 : vector<8x256xf32>
    %cst_31 = arith.constant 5.000000e-01 : f32
    %48 = vector.broadcast %cst_31 : f32 to vector<8x256xf32>
    %49 = arith.mulf %48, %47 : vector<8x256xf32>
    %cst_32 = arith.constant dense<0.000000e+00> : vector<8xf32>
    %50 = vector.multi_reduction <add>, %49, %cst_32 [1] : vector<8x256xf32> to vector<8xf32>
    %51 = vector.shape_cast %50 : vector<8xf32> to vector<8x1xf32>
    %cst_33 = arith.constant dense<0.000000e+00> : vector<1xf32>
    %52 = vector.multi_reduction <add>, %51, %cst_33 [0] : vector<8x1xf32> to vector<1xf32>
    %53 = vector.shape_cast %52 : vector<1xf32> to vector<1x1xf32>
    %c0_34 = arith.constant 0 : index
    %c0_35 = arith.constant 0 : index
    %c0_36 = arith.constant 0 : index
    %54 = vector.load %arg21[%c0_34, %c0_35, %c0_36] : memref<1x1x1xf32, #tpu.memory_space<vmem>>, vector<1x1x1xf32>
    %55 = vector.shape_cast %54 : vector<1x1x1xf32> to vector<1x1xf32>
    %56 = vector.shape_cast %53 : vector<1x1xf32> to vector<1x1x1xf32>
    tpu.vector_store %arg21[%c0_34, %c0_35, %c0_36], %56 {strides = array<i32>} : memref<1x1x1xf32, #tpu.memory_space<vmem>>, vector<1x1x1xf32>,
    %c0_37 = arith.constant 0 : index
    %c0_38 = arith.constant 0 : index
    %57 = vector.load %arg12[%c0_37, %c0_38] : memref<32x8xf32, #tpu.memory_space<vmem>>, vector<32x8xf32>
    %cst_39 = arith.constant dense<0.000000e+00> : vector<32x256xf32>
    %58 = tpu.matmul %57, %37, %cst_39 {dimension_numbers = #tpu.dot_dimension_numbers<[1], [0], [0], [1], [0, 0, 1, 1], [], []>} : vector<32x8xf32>, vector<8x256xf32>, vector<32x256xf32> -> vector<32x256xf32>
    %c0_40 = arith.constant 0 : index
    %c0_41 = arith.constant 0 : index
    %59 = vector.load %arg13[%c0_40, %c0_41] : memref<32x1xf32, #tpu.memory_space<vmem>>, vector<32x1xf32>
    %60 = vector.broadcast %59 : vector<32x1xf32> to vector<32x256xf32>
    %61 = arith.addf %58, %60 : vector<32x256xf32>
    %c0_42 = arith.constant 0 : index
    %c0_43 = arith.constant 0 : index
    %62 = vector.load %arg14[%c0_42, %c0_43] : memref<32x64xf32, #tpu.memory_space<vmem>>, vector<32x64xf32>
    %63 = tpu.concatenate %61, %5 in 0 : vector<32x256xf32>, vector<32x256xf32> -> vector<64x256xf32>
    %cst_44 = arith.constant dense<0.000000e+00> : vector<32x256xf32>
    %64 = tpu.matmul %62, %63, %cst_44 {dimension_numbers = #tpu.dot_dimension_numbers<[1], [0], [0], [1], [0, 0, 1, 1], [], []>} : vector<32x64xf32>, vector<64x256xf32>, vector<32x256xf32> -> vector<32x256xf32>
    %c0_45 = arith.constant 0 : index
    %c0_46 = arith.constant 0 : index
    %65 = vector.load %arg15[%c0_45, %c0_46] : memref<32x1xf32, #tpu.memory_space<vmem>>, vector<32x1xf32>
    %66 = vector.broadcast %65 : vector<32x1xf32> to vector<32x256xf32>
    %67 = arith.addf %64, %66 : vector<32x256xf32>
    %cst_47 = arith.constant 0.000000e+00 : f32
    %68 = vector.broadcast %cst_47 : f32 to vector<32x256xf32>
    %69 = arith.maximumf %67, %68 : vector<32x256xf32>
    %c0_48 = arith.constant 0 : index
    %c0_49 = arith.constant 0 : index
    %70 = vector.load %arg16[%c0_48, %c0_49] : memref<32x64xf32, #tpu.memory_space<vmem>>, vector<32x64xf32>
    %71 = tpu.concatenate %69, %7 in 0 : vector<32x256xf32>, vector<32x256xf32> -> vector<64x256xf32>
    %cst_50 = arith.constant dense<0.000000e+00> : vector<32x256xf32>
    %72 = tpu.matmul %70, %71, %cst_50 {dimension_numbers = #tpu.dot_dimension_numbers<[1], [0], [0], [1], [0, 0, 1, 1], [], []>} : vector<32x64xf32>, vector<64x256xf32>, vector<32x256xf32> -> vector<32x256xf32>
    %c0_51 = arith.constant 0 : index
    %c0_52 = arith.constant 0 : index
    %73 = vector.load %arg17[%c0_51, %c0_52] : memref<32x1xf32, #tpu.memory_space<vmem>>, vector<32x1xf32>
    %74 = vector.broadcast %73 : vector<32x1xf32> to vector<32x256xf32>
    %75 = arith.addf %72, %74 : vector<32x256xf32>
    %cst_53 = arith.constant 0.000000e+00 : f32
    %76 = vector.broadcast %cst_53 : f32 to vector<32x256xf32>
    %77 = arith.maximumf %75, %76 : vector<32x256xf32>
    %78 = arith.addf %77, %69 : vector<32x256xf32>
    %c0_54 = arith.constant 0 : index
    %c0_55 = arith.constant 0 : index
    %c0_56 = arith.constant 0 : index
    %79 = vector.load %arg18[%c0_54, %c0_55, %c0_56] : memref<1x32x256xf32, #tpu.memory_space<vmem>>, vector<1x32x256xf32>
    %80 = vector.shape_cast %79 : vector<1x32x256xf32> to vector<32x256xf32>
    %81 = vector.shape_cast %69 : vector<32x256xf32> to vector<1x32x256xf32>
    tpu.vector_store %arg18[%c0_54, %c0_55, %c0_56], %81 {strides = array<i32>} : memref<1x32x256xf32, #tpu.memory_space<vmem>>, vector<1x32x256xf32>,
    %c0_57 = arith.constant 0 : index
    %c0_58 = arith.constant 0 : index
    %c0_59 = arith.constant 0 : index
    %82 = vector.load %arg19[%c0_57, %c0_58, %c0_59] : memref<1x32x256xf32, #tpu.memory_space<vmem>>, vector<1x32x256xf32>
    %83 = vector.shape_cast %82 : vector<1x32x256xf32> to vector<32x256xf32>
    %84 = vector.shape_cast %78 : vector<32x256xf32> to vector<1x32x256xf32>
    tpu.vector_store %arg19[%c0_57, %c0_58, %c0_59], %84 {strides = array<i32>} : memref<1x32x256xf32, #tpu.memory_space<vmem>>, vector<1x32x256xf32>,
    %c0_60 = arith.constant 0 : index
    %c0_61 = arith.constant 0 : index
    %c0_62 = arith.constant 0 : index
    %85 = vector.load %arg20[%c0_60, %c0_61, %c0_62] : memref<1x8x256xf32, #tpu.memory_space<vmem>>, vector<1x8x256xf32>
    %86 = vector.shape_cast %85 : vector<1x8x256xf32> to vector<8x256xf32>
    %87 = vector.shape_cast %37 : vector<8x256xf32> to vector<1x8x256xf32>
    tpu.vector_store %arg20[%c0_60, %c0_61, %c0_62], %87 {strides = array<i32>} : memref<1x8x256xf32, #tpu.memory_space<vmem>>, vector<1x8x256xf32>,
    return
  }
  func.func @transform_0(%arg0: i32) -> (i32, i32, i32) {
    %c0_i32 = arith.constant 0 : i32
    %c0_i32_0 = arith.constant 0 : i32
    %c0_i32_1 = arith.constant 0 : i32
    return %arg0, %c0_i32, %c0_i32_0 : i32, i32, i32
  }
  func.func @transform_1(%arg0: i32) -> (i32, i32, i32) {
    %c0_i32 = arith.constant 0 : i32
    %c0_i32_0 = arith.constant 0 : i32
    %c0_i32_1 = arith.constant 0 : i32
    return %arg0, %c0_i32, %c0_i32_0 : i32, i32, i32
  }
  func.func @transform_2(%arg0: i32) -> (i32, i32, i32) {
    %c0_i32 = arith.constant 0 : i32
    %c0_i32_0 = arith.constant 0 : i32
    %c0_i32_1 = arith.constant 0 : i32
    return %arg0, %c0_i32, %c0_i32_0 : i32, i32, i32
  }
  func.func @transform_3(%arg0: i32) -> (i32, i32, i32) {
    %c0_i32 = arith.constant 0 : i32
    %c0_i32_0 = arith.constant 0 : i32
    %c0_i32_1 = arith.constant 0 : i32
    return %arg0, %c0_i32, %c0_i32_0 : i32, i32, i32
  }
  func.func @transform_4(%arg0: i32) -> (i32, i32, i32) {
    %c0_i32 = arith.constant 0 : i32
    %c0_i32_0 = arith.constant 0 : i32
    %c0_i32_1 = arith.constant 0 : i32
    return %arg0, %c0_i32, %c0_i32_0 : i32, i32, i32
  }
  func.func @transform_5(%arg0: i32) -> (i32, i32) {
    %c0_i32 = arith.constant 0 : i32
    %c0_i32_0 = arith.constant 0 : i32
    %c0_i32_1 = arith.constant 0 : i32
    return %c0_i32, %c0_i32_0 : i32, i32
  }
  func.func @transform_6(%arg0: i32) -> (i32, i32) {
    %c0_i32 = arith.constant 0 : i32
    %c0_i32_0 = arith.constant 0 : i32
    %c0_i32_1 = arith.constant 0 : i32
    return %c0_i32, %c0_i32_0 : i32, i32
  }
  func.func @transform_7(%arg0: i32) -> (i32, i32) {
    %c0_i32 = arith.constant 0 : i32
    %c0_i32_0 = arith.constant 0 : i32
    %c0_i32_1 = arith.constant 0 : i32
    return %c0_i32, %c0_i32_0 : i32, i32
  }
  func.func @transform_8(%arg0: i32) -> (i32, i32) {
    %c0_i32 = arith.constant 0 : i32
    %c0_i32_0 = arith.constant 0 : i32
    %c0_i32_1 = arith.constant 0 : i32
    return %c0_i32, %c0_i32_0 : i32, i32
  }
  func.func @transform_9(%arg0: i32) -> (i32, i32) {
    %c0_i32 = arith.constant 0 : i32
    %c0_i32_0 = arith.constant 0 : i32
    %c0_i32_1 = arith.constant 0 : i32
    return %c0_i32, %c0_i32_0 : i32, i32
  }
  func.func @transform_10(%arg0: i32) -> (i32, i32) {
    %c0_i32 = arith.constant 0 : i32
    %c0_i32_0 = arith.constant 0 : i32
    %c0_i32_1 = arith.constant 0 : i32
    return %c0_i32, %c0_i32_0 : i32, i32
  }
  func.func @transform_11(%arg0: i32) -> (i32, i32) {
    %c0_i32 = arith.constant 0 : i32
    %c0_i32_0 = arith.constant 0 : i32
    %c0_i32_1 = arith.constant 0 : i32
    return %c0_i32, %c0_i32_0 : i32, i32
  }
  func.func @transform_12(%arg0: i32) -> (i32, i32) {
    %c0_i32 = arith.constant 0 : i32
    %c0_i32_0 = arith.constant 0 : i32
    %c0_i32_1 = arith.constant 0 : i32
    return %c0_i32, %c0_i32_0 : i32, i32
  }
  func.func @transform_13(%arg0: i32) -> (i32, i32) {
    %c0_i32 = arith.constant 0 : i32
    %c0_i32_0 = arith.constant 0 : i32
    %c0_i32_1 = arith.constant 0 : i32
    return %c0_i32, %c0_i32_0 : i32, i32
  }
  func.func @transform_14(%arg0: i32) -> (i32, i32) {
    %c0_i32 = arith.constant 0 : i32
    %c0_i32_0 = arith.constant 0 : i32
    %c0_i32_1 = arith.constant 0 : i32
    return %c0_i32, %c0_i32_0 : i32, i32
  }
  func.func @transform_15(%arg0: i32) -> (i32, i32) {
    %c0_i32 = arith.constant 0 : i32
    %c0_i32_0 = arith.constant 0 : i32
    %c0_i32_1 = arith.constant 0 : i32
    return %c0_i32, %c0_i32_0 : i32, i32
  }
  func.func @transform_16(%arg0: i32) -> (i32, i32) {
    %c0_i32 = arith.constant 0 : i32
    %c0_i32_0 = arith.constant 0 : i32
    %c0_i32_1 = arith.constant 0 : i32
    return %c0_i32, %c0_i32_0 : i32, i32
  }
  func.func @transform_17(%arg0: i32) -> (i32, i32, i32) {
    %c0_i32 = arith.constant 0 : i32
    %c0_i32_0 = arith.constant 0 : i32
    %c0_i32_1 = arith.constant 0 : i32
    return %arg0, %c0_i32, %c0_i32_0 : i32, i32, i32
  }
  func.func @transform_18(%arg0: i32) -> (i32, i32, i32) {
    %c0_i32 = arith.constant 0 : i32
    %c0_i32_0 = arith.constant 0 : i32
    %c0_i32_1 = arith.constant 0 : i32
    return %arg0, %c0_i32, %c0_i32_0 : i32, i32, i32
  }
  func.func @transform_19(%arg0: i32) -> (i32, i32, i32) {
    %c0_i32 = arith.constant 0 : i32
    %c0_i32_0 = arith.constant 0 : i32
    %c0_i32_1 = arith.constant 0 : i32
    return %arg0, %c0_i32, %c0_i32_0 : i32, i32, i32
  }
  func.func @transform_20(%arg0: i32) -> (i32, i32, i32) {
    %c0_i32 = arith.constant 0 : i32
    %c0_i32_0 = arith.constant 0 : i32
    %c0_i32_1 = arith.constant 0 : i32
    return %arg0, %c0_i32, %c0_i32_0 : i32, i32, i32
  }
}

</mosaic_0001>

<llo_original>
// kernel: lvae_stage_forward.1
$region0: #{lvae_stage_forward.1}
  #allocation0 [shape = 'u32[]', space=smem, size = 0x4, offset = 0x4, fixed_abs, tag = 'smem constant byte address 0x4 - core index']
  #allocation1 [shape = 'u32[144,128]{1,0:T(1,128)}', space=vmem, size = 0x12000, scoped, tag = 'internal scratch']
  %s0 = inlined_call_operand.vmem [shape: f32[2,32,256], index: 0, kind: input, shape index: {}]
  %s1 = inlined_call_operand.vmem [shape: f32[2,32,256], index: 1, kind: input, shape index: {}]
  %s2 = inlined_call_operand.vmem [shape: f32[2,32,256], index: 2, kind: input, shape index: {}]
  %s3 = inlined_call_operand.vmem [shape: f32[2,32,256], index: 3, kind: input, shape index: {}]
  %s4 = inlined_call_operand.vmem [shape: f32[2,8,256], index: 4, kind: input, shape index: {}]
  %s5 = inlined_call_operand.vmem [shape: f32[16,32], index: 5, kind: input, shape index: {}]
  %s6 = inlined_call_operand.vmem [shape: f32[16,1], index: 6, kind: input, shape index: {}]
  %s7 = inlined_call_operand.vmem [shape: f32[32,64], index: 7, kind: input, shape index: {}]
  %s8 = inlined_call_operand.vmem [shape: f32[32,1], index: 8, kind: input, shape index: {}]
  %s9 = inlined_call_operand.vmem [shape: f32[16,32], index: 9, kind: input, shape index: {}]
  %s10 = inlined_call_operand.vmem [shape: f32[16,1], index: 10, kind: input, shape index: {}]
  %s11 = inlined_call_operand.vmem [shape: f32[32,8], index: 11, kind: input, shape index: {}]
  %s12 = inlined_call_operand.vmem [shape: f32[32,1], index: 12, kind: input, shape index: {}]
  %s13 = inlined_call_operand.vmem [shape: f32[32,64], index: 13, kind: input, shape index: {}]
  %s14 = inlined_call_operand.vmem [shape: f32[32,1], index: 14, kind: input, shape index: {}]
  %s15 = inlined_call_operand.vmem [shape: f32[32,64], index: 15, kind: input, shape index: {}]
  %s16 = inlined_call_operand.vmem [shape: f32[32,1], index: 16, kind: input, shape index: {}]
  %s17 = inlined_call_operand.vmem [shape: f32[2,32,256], index: 17, kind: output, shape index: {0}]
  %s18 = inlined_call_operand.vmem [shape: f32[2,32,256], index: 18, kind: output, shape index: {1}]
  %s19 = inlined_call_operand.vmem [shape: f32[2,8,256], index: 19, kind: output, shape index: {2}]
  %s20 = inlined_call_operand.vmem [shape: f32[2,1,1], index: 20, kind: output, shape index: {3}]
  %21 = xla_tuple %s17, %s18, %s19, %s20
  %s22 = sld [smem:[#allocation0]]
  $region125: #{lvae_stage_forward.1} parent=0
    _
  %s24 = ssub.s32 1, %s22
  %s25 = scalar_select 0, %s24, %s22
  loop: start=0, step=1, limit=4
  $region2: #{lvae_stage_forward.1} parent=0 // loop_pre_header
    _
  $region3: #{lvae_stage_forward.1} parent=0 // loop_header
    %s27 = sphi 0, %s31
    %p28 = scmp.ge.s32.totalorder %s27, 4
    %s37 = sphi 0, %s39
    %s40 = sphi 0, %s37
    %s41 = sphi 0, %s40
    %s57 = sphi 0, %s41
    %s63 = sphi 0, %s65
    %s66 = sphi 0, %s63
    %s67 = sphi 0, %s66
    %s83 = sphi 0, %s67
    %s89 = sphi 0, %s91
    %s92 = sphi 0, %s89
    %s93 = sphi 0, %s92
    %s109 = sphi 0, %s93
    %s115 = sphi 0, %s117
    %s118 = sphi 0, %s115
    %s119 = sphi 0, %s118
    %s135 = sphi 0, %s119
    %s141 = sphi 0, %s143
    %s144 = sphi 0, %s141
    %s145 = sphi 0, %s144
    %s161 = sphi 0, %s145
    %s165 = sphi 0, %s165
    %s167 = sphi 0, %s165
    %s168 = sphi 0, %s167
    %s182 = sphi 0, %s168
    %s186 = sphi 0, %s186
    %s188 = sphi 0, %s186
    %s189 = sphi 0, %s188
    %s203 = sphi 0, %s189
    %s207 = sphi 0, %s207
    %s209 = sphi 0, %s207
    %s210 = sphi 0, %s209
    %s224 = sphi 0, %s210
    %s228 = sphi 0, %s228
    %s230 = sphi 0, %s228
    %s231 = sphi 0, %s230
    %s245 = sphi 0, %s231
    %s249 = sphi 0, %s249
    %s251 = sphi 0, %s249
    %s252 = sphi 0, %s251
    %s266 = sphi 0, %s252
    %s270 = sphi 0, %s270
    %s272 = sphi 0, %s270
    %s273 = sphi 0, %s272
    %s287 = sphi 0, %s273
    %s291 = sphi 0, %s291
    %s293 = sphi 0, %s291
    %s294 = sphi 0, %s293
    %s308 = sphi 0, %s294
    %s312 = sphi 0, %s312
    %s314 = sphi 0, %s312
    %s315 = sphi 0, %s314
    %s329 = sphi 0, %s315
    %s333 = sphi 0, %s333
    %s335 = sphi 0, %s333
    %s336 = sphi 0, %s335
    %s350 = sphi 0, %s336
    %s354 = sphi 0, %s354
    %s356 = sphi 0, %s354
    %s357 = sphi 0, %s356
    %s371 = sphi 0, %s357
    %s375 = sphi 0, %s375
    %s377 = sphi 0, %s375
    %s378 = sphi 0, %s377
    %s392 = sphi 0, %s378
    %s396 = sphi 0, %s396
    %s398 = sphi 0, %s396
    %s399 = sphi 0, %s398
    %s413 = sphi 0, %s399
    %s419 = sphi 0, %s421
    %s422 = sphi 0, %s419
    %s423 = sphi 0, %s422
    %s439 = sphi 0, %s423
    %s445 = sphi 0, %s447
    %s448 = sphi 0, %s445
    %s449 = sphi 0, %s448
    %s465 = sphi 0, %s449
    %s471 = sphi 0, %s473
    %s474 = sphi 0, %s471
    %s475 = sphi 0, %s474
    %s491 = sphi 0, %s475
    %s497 = sphi 0, %s499
    %s500 = sphi 0, %s497
    %s501 = sphi 0, %s500
    %s517 = sphi 0, %s501
  $region4: #{lvae_stage_forward.1} parent=0 // loop_header_branch
    %30 = sbr.rel (%p28) target = $region8
  $region5: #{lvae_stage_forward.1} parent=0 // loop_body
    %s32 = ssub.s32 %s27, 1
    %s33 = ssub.s32 %s27, 2
    %s34 = sadd.s32 %s27, 1
    %s35 = ssub.s32 %s27, %s34
    %p36 = scmp.eq.s32.totalorder %s35, 0
    %s38 = sadd.s32 %s37, 1
    %s39 = scalar_select %p36, %s37, %s38
    %p42 = pneg %p36
    %p43 = scmp.eq.s32.totalorder %s27, 1
    %p44 = por %p42, %p43
    %p45 = scmp.ne.s32.totalorder %s37, %s40
    %p46 = scmp.eq.s32.totalorder %s27, 0
    %p47 = por %p45, %p46
    %p48 = scmp.ne.s32.totalorder %s37, %s40
    %p49 = scmp.eq.s32.totalorder %s32, 1
    %p50 = por %p48, %p49
    %p51 = scmp.ne.s32.totalorder %s40, %s41
    %p52 = scmp.eq.s32.totalorder %s32, 0
    %p53 = por %p51, %p52
    %p54 = scmp.ne.s32.totalorder %s40, %s41
    %p55 = scmp.eq.s32.totalorder %s33, 1
    %p56 = por %p54, %p55
    %p58 = scmp.ne.s32.totalorder %s41, %s57
    %p59 = scmp.eq.s32.totalorder %s33, 0
    %p60 = por %p58, %p59
    %s61 = ssub.s32 %s27, %s34
    %p62 = scmp.eq.s32.totalorder %s61, 0
    %s64 = sadd.s32 %s63, 1
    %s65 = scalar_select %p62, %s63, %s64
    %p68 = pneg %p62
    %p69 = scmp.eq.s32.totalorder %s27, 1
    %p70 = por %p68, %p69
    %p71 = scmp.ne.s32.totalorder %s63, %s66
    %p72 = scmp.eq.s32.totalorder %s27, 0
    %p73 = por %p71, %p72
    %p74 = scmp.ne.s32.totalorder %s63, %s66
    %p75 = scmp.eq.s32.totalorder %s32, 1
    %p76 = por %p74, %p75
    %p77 = scmp.ne.s32.totalorder %s66, %s67
    %p78 = scmp.eq.s32.totalorder %s32, 0
    %p79 = por %p77, %p78
    %p80 = scmp.ne.s32.totalorder %s66, %s67
    %p81 = scmp.eq.s32.totalorder %s33, 1
    %p82 = por %p80, %p81
    %p84 = scmp.ne.s32.totalorder %s67, %s83
    %p85 = scmp.eq.s32.totalorder %s33, 0
    %p86 = por %p84, %p85
    %s87 = ssub.s32 %s27, %s34
    %p88 = scmp.eq.s32.totalorder %s87, 0
    %s90 = sadd.s32 %s89, 1
    %s91 = scalar_select %p88, %s89, %s90
    %p94 = pneg %p88
    %p95 = scmp.eq.s32.totalorder %s27, 1
    %p96 = por %p94, %p95
    %p97 = scmp.ne.s32.totalorder %s89, %s92
    %p98 = scmp.eq.s32.totalorder %s27, 0
    %p99 = por %p97, %p98
    %p100 = scmp.ne.s32.totalorder %s89, %s92
    %p101 = scmp.eq.s32.totalorder %s32, 1
    %p102 = por %p100, %p101
    %p103 = scmp.ne.s32.totalorder %s92, %s93
    %p104 = scmp.eq.s32.totalorder %s32, 0
    %p105 = por %p103, %p104
    %p106 = scmp.ne.s32.totalorder %s92, %s93
    %p107 = scmp.eq.s32.totalorder %s33, 1
    %p108 = por %p106, %p107
    %p110 = scmp.ne.s32.totalorder %s93, %s109
    %p111 = scmp.eq.s32.totalorder %s33, 0
    %p112 = por %p110, %p111
    %s113 = ssub.s32 %s27, %s34
    %p114 = scmp.eq.s32.totalorder %s113, 0
    %s116 = sadd.s32 %s115, 1
    %s117 = scalar_select %p114, %s115, %s116
    %p120 = pneg %p114
    %p121 = scmp.eq.s32.totalorder %s27, 1
    %p122 = por %p120, %p121
    %p123 = scmp.ne.s32.totalorder %s115, %s118
    %p124 = scmp.eq.s32.totalorder %s27, 0
    %p125 = por %p123, %p124
    %p126 = scmp.ne.s32.totalorder %s115, %s118
    %p127 = scmp.eq.s32.totalorder %s32, 1
    %p128 = por %p126, %p127
    %p129 = scmp.ne.s32.totalorder %s118, %s119
    %p130 = scmp.eq.s32.totalorder %s32, 0
    %p131 = por %p129, %p130
    %p132 = scmp.ne.s32.totalorder %s118, %s119
    %p133 = scmp.eq.s32.totalorder %s33, 1
    %p134 = por %p132, %p133
    %p136 = scmp.ne.s32.totalorder %s119, %s135
    %p137 = scmp.eq.s32.totalorder %s33, 0
    %p138 = por %p136, %p137
    %s139 = ssub.s32 %s27, %s34
    %p140 = scmp.eq.s32.totalorder %s139, 0
    %s142 = sadd.s32 %s141, 1
    %s143 = scalar_select %p140, %s141, %s142
    %p146 = pneg %p140
    %p147 = scmp.eq.s32.totalorder %s27, 1
    %p148 = por %p146, %p147
    %p149 = scmp.ne.s32.totalorder %s141, %s144
    %p150 = scmp.eq.s32.totalorder %s27, 0
    %p151 = por %p149, %p150
    %p152 = scmp.ne.s32.totalorder %s141, %s144
    %p153 = scmp.eq.s32.totalorder %s32, 1
    %p154 = por %p152, %p153
    %p155 = scmp.ne.s32.totalorder %s144, %s145
    %p156 = scmp.eq.s32.totalorder %s32, 0
    %p157 = por %p155, %p156
    %p158 = scmp.ne.s32.totalorder %s144, %s145
    %p159 = scmp.eq.s32.totalorder %s33, 1
    %p160 = por %p158, %p159
    %p162 = scmp.ne.s32.totalorder %s145, %s161
    %p163 = scmp.eq.s32.totalorder %s33, 0
    %p164 = por %p162, %p163
    %s166 = sadd.s32 %s165, 1
    %p169 = scmp.eq.s32.totalorder %s27, 1
    %p170 = scmp.ne.s32.totalorder %s165, %s167
    %p171 = scmp.eq.s32.totalorder %s27, 0
    %p172 = por %p170, %p171
    %p173 = scmp.ne.s32.totalorder %s165, %s167
    %p174 = scmp.eq.s32.totalorder %s32, 1
    %p175 = por %p173, %p174
    %p176 = scmp.ne.s32.totalorder %s167, %s168
    %p177 = scmp.eq.s32.totalorder %s32, 0
    %p178 = por %p176, %p177
    %p179 = scmp.ne.s32.totalorder %s167, %s168
    %p180 = scmp.eq.s32.totalorder %s33, 1
    %p181 = por %p179, %p180
    %p183 = scmp.ne.s32.totalorder %s168, %s182
    %p184 = scmp.eq.s32.totalorder %s33, 0
    %p185 = por %p183, %p184
    %s187 = sadd.s32 %s186, 1
    %p190 = scmp.eq.s32.totalorder %s27, 1
    %p191 = scmp.ne.s32.totalorder %s186, %s188
    %p192 = scmp.eq.s32.totalorder %s27, 0
    %p193 = por %p191, %p192
    %p194 = scmp.ne.s32.totalorder %s186, %s188
    %p195 = scmp.eq.s32.totalorder %s32, 1
    %p196 = por %p194, %p195
    %p197 = scmp.ne.s32.totalorder %s188, %s189
    %p198 = scmp.eq.s32.totalorder %s32, 0
    %p199 = por %p197, %p198
    %p200 = scmp.ne.s32.totalorder %s188, %s189
    %p201 = scmp.eq.s32.totalorder %s33, 1
    %p202 = por %p200, %p201
    %p204 = scmp.ne.s32.totalorder %s189, %s203
    %p205 = scmp.eq.s32.totalorder %s33, 0
    %p206 = por %p204, %p205
    %s208 = sadd.s32 %s207, 1
    %p211 = scmp.eq.s32.totalorder %s27, 1
    %p212 = scmp.ne.s32.totalorder %s207, %s209
    %p213 = scmp.eq.s32.totalorder %s27, 0
    %p214 = por %p212, %p213
    %p215 = scmp.ne.s32.totalorder %s207, %s209
    %p216 = scmp.eq.s32.totalorder %s32, 1
    %p217 = por %p215, %p216
    %p218 = scmp.ne.s32.totalorder %s209, %s210
    %p219 = scmp.eq.s32.totalorder %s32, 0
    %p220 = por %p218, %p219
    %p221 = scmp.ne.s32.totalorder %s209, %s210
    %p222 = scmp.eq.s32.totalorder %s33, 1
    %p223 = por %p221, %p222
    %p225 = scmp.ne.s32.totalorder %s210, %s224
    %p226 = scmp.eq.s32.totalorder %s33, 0
    %p227 = por %p225, %p226
    %s229 = sadd.s32 %s228, 1
    %p232 = scmp.eq.s32.totalorder %s27, 1
    %p233 = scmp.ne.s32.totalorder %s228, %s230
    %p234 = scmp.eq.s32.totalorder %s27, 0
    %p235 = por %p233, %p234
    %p236 = scmp.ne.s32.totalorder %s228, %s230
    %p237 = scmp.eq.s32.totalorder %s32, 1
    %p238 = por %p236, %p237
    %p239 = scmp.ne.s32.totalorder %s230, %s231
    %p240 = scmp.eq.s32.totalorder %s32, 0
    %p241 = por %p239, %p240
    %p242 = scmp.ne.s32.totalorder %s230, %s231
    %p243 = scmp.eq.s32.totalorder %s33, 1
    %p244 = por %p242, %p243
    %p246 = scmp.ne.s32.totalorder %s231, %s245
    %p247 = scmp.eq.s32.totalorder %s33, 0
    %p248 = por %p246, %p247
    %s250 = sadd.s32 %s249, 1
    %p253 = scmp.eq.s32.totalorder %s27, 1
    %p254 = scmp.ne.s32.totalorder %s249, %s251
    %p255 = scmp.eq.s32.totalorder %s27, 0
    %p256 = por %p254, %p255
    %p257 = scmp.ne.s32.totalorder %s249, %s251
    %p258 = scmp.eq.s32.totalorder %s32, 1
    %p259 = por %p257, %p258
    %p260 = scmp.ne.s32.totalorder %s251, %s252
    %p261 = scmp.eq.s32.totalorder %s32, 0
    %p262 = por %p260, %p261
    %p263 = scmp.ne.s32.totalorder %s251, %s252
    %p264 = scmp.eq.s32.totalorder %s33, 1
    %p265 = por %p263, %p264
    %p267 = scmp.ne.s32.totalorder %s252, %s266
    %p268 = scmp.eq.s32.totalorder %s33, 0
    %p269 = por %p267, %p268
    %s271 = sadd.s32 %s270, 1
    %p274 = scmp.eq.s32.totalorder %s27, 1
    %p275 = scmp.ne.s32.totalorder %s270, %s272
    %p276 = scmp.eq.s32.totalorder %s27, 0
    %p277 = por %p275, %p276
    %p278 = scmp.ne.s32.totalorder %s270, %s272
    %p279 = scmp.eq.s32.totalorder %s32, 1
    %p280 = por %p278, %p279
    %p281 = scmp.ne.s32.totalorder %s272, %s273
    %p282 = scmp.eq.s32.totalorder %s32, 0
    %p283 = por %p281, %p282
    %p284 = scmp.ne.s32.totalorder %s272, %s273
    %p285 = scmp.eq.s32.totalorder %s33, 1
    %p286 = por %p284, %p285
    %p288 = scmp.ne.s32.totalorder %s273, %s287
    %p289 = scmp.eq.s32.totalorder %s33, 0
    %p290 = por %p288, %p289
    %s292 = sadd.s32 %s291, 1
    %p295 = scmp.eq.s32.totalorder %s27, 1
    %p296 = scmp.ne.s32.totalorder %s291, %s293
    %p297 = scmp.eq.s32.totalorder %s27, 0
    %p298 = por %p296, %p297
    %p299 = scmp.ne.s32.totalorder %s291, %s293
    %p300 = scmp.eq.s32.totalorder %s32, 1
    %p301 = por %p299, %p300
    %p302 = scmp.ne.s32.totalorder %s293, %s294
    %p303 = scmp.eq.s32.totalorder %s32, 0
    %p304 = por %p302, %p303
    %p305 = scmp.ne.s32.totalorder %s293, %s294
    %p306 = scmp.eq.s32.totalorder %s33, 1
    %p307 = por %p305, %p306
    %p309 = scmp.ne.s32.totalorder %s294, %s308
    %p310 = scmp.eq.s32.totalorder %s33, 0
    %p311 = por %p309, %p310
    %s313 = sadd.s32 %s312, 1
    %p316 = scmp.eq.s32.totalorder %s27, 1
    %p317 = scmp.ne.s32.totalorder %s312, %s314
    %p318 = scmp.eq.s32.totalorder %s27, 0
    %p319 = por %p317, %p318
    %p320 = scmp.ne.s32.totalorder %s312, %s314
    %p321 = scmp.eq.s32.totalorder %s32, 1
    %p322 = por %p320, %p321
    %p323 = scmp.ne.s32.totalorder %s314, %s315
    %p324 = scmp.eq.s32.totalorder %s32, 0
    %p325 = por %p323, %p324
    %p326 = scmp.ne.s32.totalorder %s314, %s315
    %p327 = scmp.eq.s32.totalorder %s33, 1
    %p328 = por %p326, %p327
    %p330 = scmp.ne.s32.totalorder %s315, %s329
    %p331 = scmp.eq.s32.totalorder %s33, 0
    %p332 = por %p330, %p331
    %s334 = sadd.s32 %s333, 1
    %p337 = scmp.eq.s32.totalorder %s27, 1
    %p338 = scmp.ne.s32.totalorder %s333, %s335
    %p339 = scmp.eq.s32.totalorder %s27, 0
    %p340 = por %p338, %p339
    %p341 = scmp.ne.s32.totalorder %s333, %s335
    %p342 = scmp.eq.s32.totalorder %s32, 1
    %p343 = por %p341, %p342
    %p344 = scmp.ne.s32.totalorder %s335, %s336
    %p345 = scmp.eq.s32.totalorder %s32, 0
    %p346 = por %p344, %p345
    %p347 = scmp.ne.s32.totalorder %s335, %s336
    %p348 = scmp.eq.s32.totalorder %s33, 1
    %p349 = por %p347, %p348
    %p351 = scmp.ne.s32.totalorder %s336, %s350
    %p352 = scmp.eq.s32.totalorder %s33, 0
    %p353 = por %p351, %p352
    %s355 = sadd.s32 %s354, 1
    %p358 = scmp.eq.s32.totalorder %s27, 1
    %p359 = scmp.ne.s32.totalorder %s354, %s356
    %p360 = scmp.eq.s32.totalorder %s27, 0
    %p361 = por %p359, %p360
    %p362 = scmp.ne.s32.totalorder %s354, %s356
    %p363 = scmp.eq.s32.totalorder %s32, 1
    %p364 = por %p362, %p363
    %p365 = scmp.ne.s32.totalorder %s356, %s357
    %p366 = scmp.eq.s32.totalorder %s32, 0
    %p367 = por %p365, %p366
    %p368 = scmp.ne.s32.totalorder %s356, %s357
    %p369 = scmp.eq.s32.totalorder %s33, 1
    %p370 = por %p368, %p369
    %p372 = scmp.ne.s32.totalorder %s357, %s371
    %p373 = scmp.eq.s32.totalorder %s33, 0
    %p374 = por %p372, %p373
    %s376 = sadd.s32 %s375, 1
    %p379 = scmp.eq.s32.totalorder %s27, 1
    %p380 = scmp.ne.s32.totalorder %s375, %s377
    %p381 = scmp.eq.s32.totalorder %s27, 0
    %p382 = por %p380, %p381
    %p383 = scmp.ne.s32.totalorder %s375, %s377
    %p384 = scmp.eq.s32.totalorder %s32, 1
    %p385 = por %p383, %p384
    %p386 = scmp.ne.s32.totalorder %s377, %s378
    %p387 = scmp.eq.s32.totalorder %s32, 0
    %p388 = por %p386, %p387
    %p389 = scmp.ne.s32.totalorder %s377, %s378
    %p390 = scmp.eq.s32.totalorder %s33, 1
    %p391 = por %p389, %p390
    %p393 = scmp.ne.s32.totalorder %s378, %s392
    %p394 = scmp.eq.s32.totalorder %s33, 0
    %p395 = por %p393, %p394
    %s397 = sadd.s32 %s396, 1
    %p400 = scmp.eq.s32.totalorder %s27, 1
    %p401 = scmp.ne.s32.totalorder %s396, %s398
    %p402 = scmp.eq.s32.totalorder %s27, 0
    %p403 = por %p401, %p402
    %p404 = scmp.ne.s32.totalorder %s396, %s398
    %p405 = scmp.eq.s32.totalorder %s32, 1
    %p406 = por %p404, %p405
    %p407 = scmp.ne.s32.totalorder %s398, %s399
    %p408 = scmp.eq.s32.totalorder %s32, 0
    %p409 = por %p407, %p408
    %p410 = scmp.ne.s32.totalorder %s398, %s399
    %p411 = scmp.eq.s32.totalorder %s33, 1
    %p412 = por %p410, %p411
    %p414 = scmp.ne.s32.totalorder %s399, %s413
    %p415 = scmp.eq.s32.totalorder %s33, 0
    %p416 = por %p414, %p415
    %s417 = ssub.s32 %s27, %s34
    %p418 = scmp.eq.s32.totalorder %s417, 0
    %s420 = sadd.s32 %s419, 1
    %s421 = scalar_select %p418, %s419, %s420
    %p424 = pneg %p418
    %p425 = scmp.eq.s32.totalorder %s27, 1
    %p426 = por %p424, %p425
    %p427 = scmp.ne.s32.totalorder %s419, %s422
    %p428 = scmp.eq.s32.totalorder %s27, 0
    %p429 = por %p427, %p428
    %p430 = scmp.ne.s32.totalorder %s419, %s422
    %p431 = scmp.eq.s32.totalorder %s32, 1
    %p432 = por %p430, %p431
    %p433 = scmp.ne.s32.totalorder %s422, %s423
    %p434 = scmp.eq.s32.totalorder %s32, 0
    %p435 = por %p433, %p434
    %p436 = scmp.ne.s32.totalorder %s422, %s423
    %p437 = scmp.eq.s32.totalorder %s33, 1
    %p438 = por %p436, %p437
    %p440 = scmp.ne.s32.totalorder %s423, %s439
    %p441 = scmp.eq.s32.totalorder %s33, 0
    %p442 = por %p440, %p441
    %s443 = ssub.s32 %s27, %s34
    %p444 = scmp.eq.s32.totalorder %s443, 0
    %s446 = sadd.s32 %s445, 1
    %s447 = scalar_select %p444, %s445, %s446
    %p450 = pneg %p444
    %p451 = scmp.eq.s32.totalorder %s27, 1
    %p452 = por %p450, %p451
    %p453 = scmp.ne.s32.totalorder %s445, %s448
    %p454 = scmp.eq.s32.totalorder %s27, 0
    %p455 = por %p453, %p454
    %p456 = scmp.ne.s32.totalorder %s445, %s448
    %p457 = scmp.eq.s32.totalorder %s32, 1
    %p458 = por %p456, %p457
    %p459 = scmp.ne.s32.totalorder %s448, %s449
    %p460 = scmp.eq.s32.totalorder %s32, 0
    %p461 = por %p459, %p460
    %p462 = scmp.ne.s32.totalorder %s448, %s449
    %p463 = scmp.eq.s32.totalorder %s33, 1
    %p464 = por %p462, %p463
    %p466 = scmp.ne.s32.totalorder %s449, %s465
    %p467 = scmp.eq.s32.totalorder %s33, 0
    %p468 = por %p466, %p467
    %s469 = ssub.s32 %s27, %s34
    %p470 = scmp.eq.s32.totalorder %s469, 0
    %s472 = sadd.s32 %s471, 1
    %s473 = scalar_select %p470, %s471, %s472
    %p476 = pneg %p470
    %p477 = scmp.eq.s32.totalorder %s27, 1
    %p478 = por %p476, %p477
    %p479 = scmp.ne.s32.totalorder %s471, %s474
    %p480 = scmp.eq.s32.totalorder %s27, 0
    %p481 = por %p479, %p480
    %p482 = scmp.ne.s32.totalorder %s471, %s474
    %p483 = scmp.eq.s32.totalorder %s32, 1
    %p484 = por %p482, %p483
    %p485 = scmp.ne.s32.totalorder %s474, %s475
    %p486 = scmp.eq.s32.totalorder %s32, 0
    %p487 = por %p485, %p486
    %p488 = scmp.ne.s32.totalorder %s474, %s475
    %p489 = scmp.eq.s32.totalorder %s33, 1
    %p490 = por %p488, %p489
    %p492 = scmp.ne.s32.totalorder %s475, %s491
    %p493 = scmp.eq.s32.totalorder %s33, 0
    %p494 = por %p492, %p493
    %s495 = ssub.s32 %s27, %s34
    %p496 = scmp.eq.s32.totalorder %s495, 0
    %s498 = sadd.s32 %s497, 1
    %s499 = scalar_select %p496, %s497, %s498
    %p502 = pneg %p496
    %p503 = scmp.eq.s32.totalorder %s27, 1
    %p504 = por %p502, %p503
    %p505 = scmp.ne.s32.totalorder %s497, %s500
    %p506 = scmp.eq.s32.totalorder %s27, 0
    %p507 = por %p505, %p506
    %p508 = scmp.ne.s32.totalorder %s497, %s500
    %p509 = scmp.eq.s32.totalorder %s32, 1
    %p510 = por %p508, %p509
    %p511 = scmp.ne.s32.totalorder %s500, %s501
    %p512 = scmp.eq.s32.totalorder %s32, 0
    %p513 = por %p511, %p512
    %p514 = scmp.ne.s32.totalorder %s500, %s501
    %p515 = scmp.eq.s32.totalorder %s33, 1
    %p516 = por %p514, %p515
    %p518 = scmp.ne.s32.totalorder %s501, %s517
    %p519 = scmp.eq.s32.totalorder %s33, 0
    %p520 = por %p518, %p519
    %p521 = scmp.le.s32.totalorder 1, %s27
    %p522 = scmp.lt.s32.totalorder %s27, 3
    %p523 = pnand %p521, %p522
    %p524 = pneg %p523
    // Predicated region
    $region9: #{lvae_stage_forward.1} parent=5 // pred_check
      _
    $region10: #{lvae_stage_forward.1} parent=5 // pred_check_branch
      %526 = sbr.rel (%p523) target = $region12
    $region11: #{lvae_stage_forward.1} parent=5 // pred_region
      %s527 = ssub.s32 %s27, 1
      // Predicated region
      $region13: #{lvae_stage_forward.1} parent=11 // pred_check
        %p528 = pneg %p178
      $region14: #{lvae_stage_forward.1} parent=11 // pred_check_branch
        %530 = sbr.rel (%p528) target = $region16
      $region15: #{lvae_stage_forward.1} parent=11 // pred_region
        _
      $region16: #{lvae_stage_forward.1} parent=11 // pred_fallthru
        _
      // Predicated region
      $region17: #{lvae_stage_forward.1} parent=11 // pred_check
        %p531 = pneg %p199
      $region18: #{lvae_stage_forward.1} parent=11 // pred_check_branch
        %533 = sbr.rel (%p531) target = $region20
      $region19: #{lvae_stage_forward.1} parent=11 // pred_region
        _
      $region20: #{lvae_stage_forward.1} parent=11 // pred_fallthru
        _
      // Predicated region
      $region21: #{lvae_stage_forward.1} parent=11 // pred_check
        %p534 = pneg %p220
      $region22: #{lvae_stage_forward.1} parent=11 // pred_check_branch
        %536 = sbr.rel (%p534) target = $region24
      $region23: #{lvae_stage_forward.1} parent=11 // pred_region
        _
      $region24: #{lvae_stage_forward.1} parent=11 // pred_fallthru
        _
      // Predicated region
      $region25: #{lvae_stage_forward.1} parent=11 // pred_check
        %p537 = pneg %p241
      $region26: #{lvae_stage_forward.1} parent=11 // pred_check_branch
        %539 = sbr.rel (%p537) target = $region28
      $region27: #{lvae_stage_forward.1} parent=11 // pred_region
        _
      $region28: #{lvae_stage_forward.1} parent=11 // pred_fallthru
        _
      // Predicated region
      $region29: #{lvae_stage_forward.1} parent=11 // pred_check
        %p540 = pneg %p262
      $region30: #{lvae_stage_forward.1} parent=11 // pred_check_branch
        %542 = sbr.rel (%p540) target = $region32
      $region31: #{lvae_stage_forward.1} parent=11 // pred_region
        _
      $region32: #{lvae_stage_forward.1} parent=11 // pred_fallthru
        _
      // Predicated region
      $region33: #{lvae_stage_forward.1} parent=11 // pred_check
        %p543 = pneg %p283
      $region34: #{lvae_stage_forward.1} parent=11 // pred_check_branch
        %545 = sbr.rel (%p543) target = $region36
      $region35: #{lvae_stage_forward.1} parent=11 // pred_region
        _
      $region36: #{lvae_stage_forward.1} parent=11 // pred_fallthru
        _
      // Predicated region
      $region37: #{lvae_stage_forward.1} parent=11 // pred_check
        %p546 = pneg %p304
      $region38: #{lvae_stage_forward.1} parent=11 // pred_check_branch
        %548 = sbr.rel (%p546) target = $region40
      $region39: #{lvae_stage_forward.1} parent=11 // pred_region
        _
      $region40: #{lvae_stage_forward.1} parent=11 // pred_fallthru
        _
      // Predicated region
      $region41: #{lvae_stage_forward.1} parent=11 // pred_check
        %p549 = pneg %p325
      $region42: #{lvae_stage_forward.1} parent=11 // pred_check_branch
        %551 = sbr.rel (%p549) target = $region44
      $region43: #{lvae_stage_forward.1} parent=11 // pred_region
        _
      $region44: #{lvae_stage_forward.1} parent=11 // pred_fallthru
        _
      // Predicated region
      $region45: #{lvae_stage_forward.1} parent=11 // pred_check
        %p552 = pneg %p346
      $region46: #{lvae_stage_forward.1} parent=11 // pred_check_branch
        %554 = sbr.rel (%p552) target = $region48
      $region47: #{lvae_stage_forward.1} parent=11 // pred_region
        _
      $region48: #{lvae_stage_forward.1} parent=11 // pred_fallthru
        _
      // Predicated region
      $region49: #{lvae_stage_forward.1} parent=11 // pred_check
        %p555 = pneg %p367
      $region50: #{lvae_stage_forward.1} parent=11 // pred_check_branch
        %557 = sbr.rel (%p555) target = $region52
      $region51: #{lvae_stage_forward.1} parent=11 // pred_region
        _
      $region52: #{lvae_stage_forward.1} parent=11 // pred_fallthru
        _
      // Predicated region
      $region53: #{lvae_stage_forward.1} parent=11 // pred_check
        %p558 = pneg %p388
      $region54: #{lvae_stage_forward.1} parent=11 // pred_check_branch
        %560 = sbr.rel (%p558) target = $region56
      $region55: #{lvae_stage_forward.1} parent=11 // pred_region
        _
      $region56: #{lvae_stage_forward.1} parent=11 // pred_fallthru
        _
      // Predicated region
      $region57: #{lvae_stage_forward.1} parent=11 // pred_check
        %p561 = pneg %p409
      $region58: #{lvae_stage_forward.1} parent=11 // pred_check_branch
        %563 = sbr.rel (%p561) target = $region60
      $region59: #{lvae_stage_forward.1} parent=11 // pred_region
        _
      $region60: #{lvae_stage_forward.1} parent=11 // pred_fallthru
        _
    $region12: #{lvae_stage_forward.1} parent=5 // pred_fallthru
      _
    %p564 = scmp.lt.s32.totalorder %s27, 2
    // Predicated region
    $region61: #{lvae_stage_forward.1} parent=5 // pred_check
      %p565 = pneg %p564
    $region62: #{lvae_stage_forward.1} parent=5 // pred_check_branch
      %567 = sbr.rel (%p565) target = $region64
    $region63: #{lvae_stage_forward.1} parent=5 // pred_region
      // Predicated region
      $region65: #{lvae_stage_forward.1} parent=63 // pred_check
        %p568 = pneg %p47
      $region66: #{lvae_stage_forward.1} parent=63 // pred_check_branch
        %570 = sbr.rel (%p568) target = $region68
      $region67: #{lvae_stage_forward.1} parent=63 // pred_region
        %p571 = scmp.lt.s32.totalorder %s27, 1
        %s572 = scalar_select %p571, %s27, 1
        %s573 = smul.addr %s572, 8
        %s574 = smul.addr %s573, 8
        %s575 = scalar_lea.vmem %s0, %s574
      $region68: #{lvae_stage_forward.1} parent=63 // pred_fallthru
        _
      // Predicated region
      $region69: #{lvae_stage_forward.1} parent=63 // pred_check
        %p576 = pneg %p73
      $region70: #{lvae_stage_forward.1} parent=63 // pred_check_branch
        %578 = sbr.rel (%p576) target = $region72
      $region71: #{lvae_stage_forward.1} parent=63 // pred_region
        %p579 = scmp.lt.s32.totalorder %s27, 1
        %s580 = scalar_select %p579, %s27, 1
        %s581 = smul.addr %s580, 8
        %s582 = smul.addr %s581, 8
        %s583 = scalar_lea.vmem %s1, %s582
      $region72: #{lvae_stage_forward.1} parent=63 // pred_fallthru
        _
      // Predicated region
      $region73: #{lvae_stage_forward.1} parent=63 // pred_check
        %p584 = pneg %p99
      $region74: #{lvae_stage_forward.1} parent=63 // pred_check_branch
        %586 = sbr.rel (%p584) target = $region76
      $region75: #{lvae_stage_forward.1} parent=63 // pred_region
        %p587 = scmp.lt.s32.totalorder %s27, 1
        %s588 = scalar_select %p587, %s27, 1
        %s589 = smul.addr %s588, 8
        %s590 = smul.addr %s589, 8
        %s591 = scalar_lea.vmem %s2, %s590
      $region76: #{lvae_stage_forward.1} parent=63 // pred_fallthru
        _
      // Predicated region
      $region77: #{lvae_stage_forward.1} parent=63 // pred_check
        %p592 = pneg %p125
      $region78: #{lvae_stage_forward.1} parent=63 // pred_check_branch
        %594 = sbr.rel (%p592) target = $region80
      $region79: #{lvae_stage_forward.1} parent=63 // pred_region
        %p595 = scmp.lt.s32.totalorder %s27, 1
        %s596 = scalar_select %p595, %s27, 1
        %s597 = smul.addr %s596, 8
        %s598 = smul.addr %s597, 8
        %s599 = scalar_lea.vmem %s3, %s598
      $region80: #{lvae_stage_forward.1} parent=63 // pred_fallthru
        _
      // Predicated region
      $region81: #{lvae_stage_forward.1} parent=63 // pred_check
        %p600 = pneg %p151
      $region82: #{lvae_stage_forward.1} parent=63 // pred_check_branch
        %602 = sbr.rel (%p600) target = $region84
      $region83: #{lvae_stage_forward.1} parent=63 // pred_region
        %p603 = scmp.lt.s32.totalorder %s27, 1
        %s604 = scalar_select %p603, %s27, 1
        %s605 = smul.addr %s604, 2
        %s606 = smul.addr %s605, 8
        %s607 = scalar_lea.vmem %s4, %s606
      $region84: #{lvae_stage_forward.1} parent=63 // pred_fallthru
        _
    $region64: #{lvae_stage_forward.1} parent=5 // pred_fallthru
      _
    %p608 = scmp.le.s32.totalorder 1, %s27
    %p609 = scmp.lt.s32.totalorder %s27, 3
    %p610 = pnand %p608, %p609
    %p611 = pneg %p610
    // Predicated region
    $region85: #{lvae_stage_forward.1} parent=5 // pred_check
      _
    $region86: #{lvae_stage_forward.1} parent=5 // pred_check_branch
      %613 = sbr.rel (%p610) target = $region88
    $region87: #{lvae_stage_forward.1} parent=5 // pred_region
      %s614 = ssub.s32 %s27, 1
      %p615 = scmp.lt.s32.totalorder %s32, 1
      %s616 = scalar_select %p615, %s32, 1
      %s617 = smul.addr %s616, 8
      %s618 = smul.addr %s617, 8
      %s619 = scalar_lea.vmem %s0, %s618
      %p620 = pneg %p53
      %p621 = pneg %p50
      %p622 = scmp.lt.s32.totalorder %s32, 1
      %s623 = scalar_select %p622, %s32, 1
      %s624 = smul.addr %s623, 8
      %s625 = smul.addr %s624, 8
      %s626 = scalar_lea.vmem %s1, %s625
      %p627 = pneg %p79
      %p628 = pneg %p76
      %p629 = scmp.lt.s32.totalorder %s32, 1
      %s630 = scalar_select %p629, %s32, 1
      %s631 = smul.addr %s630, 8
      %s632 = smul.addr %s631, 8
      %s633 = scalar_lea.vmem %s2, %s632
      %p634 = pneg %p105
      %p635 = pneg %p102
      %p636 = scmp.lt.s32.totalorder %s32, 1
      %s637 = scalar_select %p636, %s32, 1
      %s638 = smul.addr %s637, 8
      %s639 = smul.addr %s638, 8
      %s640 = scalar_lea.vmem %s3, %s639
      %p641 = pneg %p131
      %p642 = pneg %p128
      %p643 = scmp.lt.s32.totalorder %s32, 1
      %s644 = scalar_select %p643, %s32, 1
      %s645 = smul.addr %s644, 2
      %s646 = smul.addr %s645, 8
      %s647 = scalar_lea.vmem %s4, %s646
      %p648 = pneg %p157
      %p649 = pneg %p154
      %p650 = pneg %p178
      %p651 = pneg %p175
      %p652 = pneg %p199
      %p653 = pneg %p196
      %p654 = pneg %p220
      %p655 = pneg %p217
      %p656 = pneg %p241
      %p657 = pneg %p238
      %p658 = pneg %p262
      %p659 = pneg %p259
      %p660 = pneg %p283
      %p661 = pneg %p280
      %p662 = pneg %p304
      %p663 = pneg %p301
      %p664 = pneg %p325
      %p665 = pneg %p322
      %p666 = pneg %p346
      %p667 = pneg %p343
      %p668 = pneg %p367
      %p669 = pneg %p364
      %p670 = pneg %p388
      %p671 = pneg %p385
      %p672 = pneg %p409
      %p673 = pneg %p406
      %p674 = pneg %p435
      %p675 = pneg %p432
      %p676 = scmp.lt.s32.totalorder %s32, 1
      %s677 = scalar_select %p676, %s32, 1
      %s678 = smul.addr %s677, 8
      %s679 = smul.addr %s678, 8
      %s680 = scalar_lea.vmem %s17, %s679
      %p681 = pneg %p461
      %p682 = pneg %p458
      %p683 = scmp.lt.s32.totalorder %s32, 1
      %s684 = scalar_select %p683, %s32, 1
      %s685 = smul.addr %s684, 8
      %s686 = smul.addr %s685, 8
      %s687 = scalar_lea.vmem %s18, %s686
      %p688 = pneg %p487
      %p689 = pneg %p484
      %p690 = scmp.lt.s32.totalorder %s32, 1
      %s691 = scalar_select %p690, %s32, 1
      %s692 = smul.addr %s691, 2
      %s693 = smul.addr %s692, 8
      %s694 = scalar_lea.vmem %s19, %s693
      %p695 = pneg %p513
      %p696 = pneg %p510
      %p697 = scmp.lt.s32.totalorder %s32, 1
      %s698 = scalar_select %p697, %s32, 1
      %s699 = scalar_lea.vmem %s20, %s698
      %p700 = scmp.lt.s32.totalorder %s32, 1
      %s701 = scalar_select %p700, %s32, 1
      %s702 = smul.addr %s701, 8
      %s703 = smul.addr %s702, 8
      %s704 = scalar_lea.vmem %s0, %s703
      %p705 = scmp.lt.s32.totalorder %s32, 1
      %s706 = scalar_select %p705, %s32, 1
      %s707 = smul.addr %s706, 8
      %s708 = smul.addr %s707, 8
      %s709 = scalar_lea.vmem %s1, %s708
      %p710 = scmp.lt.s32.totalorder %s32, 1
      %s711 = scalar_select %p710, %s32, 1
      %s712 = smul.addr %s711, 8
      %s713 = smul.addr %s712, 8
      %s714 = scalar_lea.vmem %s2, %s713
      %p715 = scmp.lt.s32.totalorder %s32, 1
      %s716 = scalar_select %p715, %s32, 1
      %s717 = smul.addr %s716, 8
      %s718 = smul.addr %s717, 8
      %s719 = scalar_lea.vmem %s3, %s718
      %p720 = scmp.lt.s32.totalorder %s32, 1
      %s721 = scalar_select %p720, %s32, 1
      %s722 = smul.addr %s721, 2
      %s723 = smul.addr %s722, 8
      %s724 = scalar_lea.vmem %s4, %s723
      %p725 = scmp.lt.s32.totalorder %s32, 1
      %s726 = scalar_select %p725, %s32, 1
      %s727 = smul.addr %s726, 8
      %s728 = smul.addr %s727, 8
      %s729 = scalar_lea.vmem %s17, %s728
      %p730 = scmp.lt.s32.totalorder %s32, 1
      %s731 = scalar_select %p730, %s32, 1
      %s732 = smul.addr %s731, 8
      %s733 = smul.addr %s732, 8
      %s734 = scalar_lea.vmem %s18, %s733
      %p735 = scmp.lt.s32.totalorder %s32, 1
      %s736 = scalar_select %p735, %s32, 1
      %s737 = smul.addr %s736, 2
      %s738 = smul.addr %s737, 8
      %s739 = scalar_lea.vmem %s19, %s738
      %p740 = scmp.lt.s32.totalorder %s32, 1
      %s741 = scalar_select %p740, %s32, 1
      %s742 = scalar_lea.vmem %s20, %s741
      %v743 = vld [vmem:[%s704] sm:$0xff]
      %v744 = vld [vmem:[%s704 + $0x8] sm:$0xff]
      %v745 = vld [vmem:[%s704 + $0x10] sm:$0xff]
      %v746 = vld [vmem:[%s704 + $0x18] sm:$0xff]
      %v747 = vld [vmem:[%s704 + $0x20] sm:$0xff]
      %v748 = vld [vmem:[%s704 + $0x28] sm:$0xff]
      %v749 = vld [vmem:[%s704 + $0x30] sm:$0xff]
      %v750 = vld [vmem:[%s704 + $0x38] sm:$0xff]
      %v751 = vld [vmem:[%s709] sm:$0xff]
      %v752 = vld [vmem:[%s709 + $0x8] sm:$0xff]
      %v753 = vld [vmem:[%s709 + $0x10] sm:$0xff]
      %v754 = vld [vmem:[%s709 + $0x18] sm:$0xff]
      %v755 = vld [vmem:[%s709 + $0x20] sm:$0xff]
      %v756 = vld [vmem:[%s709 + $0x28] sm:$0xff]
      %v757 = vld [vmem:[%s709 + $0x30] sm:$0xff]
      %v758 = vld [vmem:[%s709 + $0x38] sm:$0xff]
      %v759 = vld [vmem:[%s714] sm:$0xff]
      %v760 = vld [vmem:[%s714 + $0x8] sm:$0xff]
      %v761 = vld [vmem:[%s714 + $0x10] sm:$0xff]
      %v762 = vld [vmem:[%s714 + $0x18] sm:$0xff]
      %v763 = vld [vmem:[%s714 + $0x20] sm:$0xff]
      %v764 = vld [vmem:[%s714 + $0x28] sm:$0xff]
      %v765 = vld [vmem:[%s714 + $0x30] sm:$0xff]
      %v766 = vld [vmem:[%s714 + $0x38] sm:$0xff]
      %v767 = vld [vmem:[%s719] sm:$0xff]
      %v768 = vld [vmem:[%s719 + $0x8] sm:$0xff]
      %v769 = vld [vmem:[%s719 + $0x10] sm:$0xff]
      %v770 = vld [vmem:[%s719 + $0x18] sm:$0xff]
      %v771 = vld [vmem:[%s719 + $0x20] sm:$0xff]
      %v772 = vld [vmem:[%s719 + $0x28] sm:$0xff]
      %v773 = vld [vmem:[%s719 + $0x30] sm:$0xff]
      %v774 = vld [vmem:[%s719 + $0x38] sm:$0xff]
      %v775 = vld [vmem:[%s724] sm:$0xff]
      %v776 = vld [vmem:[%s724 + $0x8] sm:$0xff]
      %v777 = vld [vmem:[%s5] sm:$0xff]
      %v778 = vld [vmem:[%s5 + $0x8] sm:$0xff]
      %v779 = vld [vmem:[%s6] sm:$0xff]
      %v780 = vld [vmem:[%s6 + $0x8] sm:$0xff]
      %782 = vset.pattern.permute.xlu0 0
      %783 = vperm.xlu0 %782, %v779
      %v784 = vpop.permute.xlu0 %783
      %787 = vset.pattern.permute.xlu0 0
      %788 = vperm.xlu0 %787, %v780
      %v789 = vpop.permute.xlu0 %788
      %vm791 = vcmask 261120
      %v793 = vsel %vm791, %v777, 0
      %v796 = vsel %vm791, %v778, 0
      %798 = vmatprep.subr.mxu0 %v744
      %799 = vmatpush1.msra.mxu0 %v743
      %800 = vmatprep.subr.mxu0 %v746
      %801 = vmatpush1.msra.mxu0 %v745
      %802 = vmatprep.subr.mxu0 %v748
      %803 = vmatpush1.msra.mxu0 %v747
      %804 = vmatprep.subr.mxu0 %v750
      %805 = vmatpush1.msra.mxu0 %v749
      %806 = vmatprep.subr.mxu0 0.0
      %807 = vmatpush1.msra.mxu0 0.0
      %808 = vmatprep.subr.mxu0 0.0
      %809 = vmatpush1.msra.mxu0 0.0
      %810 = vmatprep.subr.mxu0 0.0
      %811 = vmatpush1.msra.mxu0 0.0
      %812 = vmatprep.subr.mxu0 0.0
      %813 = vmatpush1.msra.mxu0 0.0
      %814 = vmatprep.subr.mxu0 0.0
      %815 = vmatpush1.msra.mxu0 0.0
      %816 = vmatprep.subr.mxu0 0.0
      %817 = vmatpush1.msra.mxu0 0.0
      %818 = vmatprep.subr.mxu0 0.0
      %819 = vmatpush1.msra.mxu0 0.0
      %820 = vmatprep.subr.mxu0 0.0
      %821 = vmatpush1.msra.mxu0 0.0
      %822 = vmatprep.subr.mxu0 0.0
      %823 = vmatpush1.msra.mxu0 0.0
      %824 = vmatprep.subr.mxu0 0.0
      %825 = vmatpush1.msra.mxu0 0.0
      %826 = vmatprep.subr.mxu0 0.0
      %827 = vmatpush1.msra.mxu0 0.0
      %828 = vmatprep.subr.mxu0 0.0
      %829 = vmatpush1.msra.mxu0 0.0
      %830 = vmatprep.subr.mxu0 0.0
      %831 = vmatpush1.msra.mxu0 0.0
      %832 = vmatprep.subr.mxu0 0.0
      %833 = vmatpush1.msra.mxu0 0.0
      %834 = vmatprep.subr.mxu0 0.0
      %835 = vmatpush1.msra.mxu0 0.0
      %836 = vmatprep.subr.mxu0 0.0
      %837 = vmatpush1.msra.mxu0 0.0
      %838 = vmatprep.subr.mxu0 0.0
      %839 = vmatpush1.msra.mxu0 0.0
      %840 = vmatprep.subr.mxu0 0.0
      %841 = vmatpush1.msra.mxu0 0.0
      %842 = vmatprep.subr.mxu0 0.0
      %843 = vmatpush1.msra.mxu0 0.0
      %844 = vmatprep.subr.mxu0 0.0
      %845 = vmatpush1.msra.mxu0 0.0
      %846 = vmatprep.subr.mxu0 0.0
      %847 = vmatpush1.msra.mxu0 0.0
      %848 = vmatprep.subr.mxu0 0.0
      %849 = vmatpush1.msra.mxu0 0.0
      %850 = vmatprep.subr.mxu0 0.0
      %851 = vmatpush1.msra.mxu0 0.0
      %852 = vmatprep.subr.mxu0 0.0
      %853 = vmatpush1.msra.mxu0 0.0
      %854 = vmatprep.subr.mxu0 0.0
      %855 = vmatpush1.msra.mxu0 0.0
      %856 = vmatprep.subr.mxu0 0.0
      %857 = vmatpush1.msra.mxu0 0.0
      %858 = vmatprep.subr.mxu0 0.0
      %859 = vmatpush1.msra.mxu0 0.0
      %860 = vmatprep.subr.mxu0 0.0
      %861 = vmatpush1.msra.mxu0 0.0
      %862 = vmatprep.mubr.f32.mxu0 0.0
      %863 = vmatmul.mubr.f32.gmra.mrb[0].mxu0 %v793
      %v864 = vpop.f32.mrb[0].mxu0
      %v865 = vadd.f32 %v784, %v864
      %v866 = vpop.f32.mrb[0].mxu0
      %v867 = vadd.f32 %v784, %v866
      %868 = vmatprep.mubr.f32.mxu0 0.0
      %869 = vmatmul.mubr.f32.gmra.mrb[0].mxu0 %v796
      %v870 = vpop.f32.mrb[0].mxu0
      %v871 = vadd.f32 %v789, %v870
      %v872 = vpop.f32.mrb[0].mxu0
      %v873 = vadd.f32 %v789, %v872
      %874 = vdwg.mxu0
      %v875 = vld [vmem:[%s7] sm:$0xff]
      %v876 = vld [vmem:[%s7 + $0x8] sm:$0xff]
      %v877 = vld [vmem:[%s7 + $0x10] sm:$0xff]
      %v878 = vld [vmem:[%s7 + $0x18] sm:$0xff]
      %v879 = vld [vmem:[%s8] sm:$0xff]
      %v880 = vld [vmem:[%s8 + $0x8] sm:$0xff]
      %v881 = vld [vmem:[%s8 + $0x10] sm:$0xff]
      %v882 = vld [vmem:[%s8 + $0x18] sm:$0xff]
      %884 = vset.pattern.permute.xlu0 0
      %885 = vperm.xlu0 %884, %v879
      %v886 = vpop.permute.xlu0 %885
      %889 = vset.pattern.permute.xlu0 0
      %890 = vperm.xlu0 %889, %v880
      %v891 = vpop.permute.xlu0 %890
      %894 = vset.pattern.permute.xlu0 0
      %895 = vperm.xlu0 %894, %v881
      %v896 = vpop.permute.xlu0 %895
      %899 = vset.pattern.permute.xlu0 0
      %900 = vperm.xlu0 %899, %v882
      %v901 = vpop.permute.xlu0 %900
      %vm903 = vcmask 523264
      %v905 = vsel %vm903, %v875, 0
      %v908 = vsel %vm903, %v876, 0
      %v911 = vsel %vm903, %v877, 0
      %v914 = vsel %vm903, %v878, 0
      %916 = vmatprep.subr.mxu0 %v752
      %917 = vmatpush1.msra.mxu0 %v751
      %918 = vmatprep.subr.mxu0 %v754
      %919 = vmatpush1.msra.mxu0 %v753
      %920 = vmatprep.subr.mxu0 %v756
      %921 = vmatpush1.msra.mxu0 %v755
      %922 = vmatprep.subr.mxu0 %v758
      %923 = vmatpush1.msra.mxu0 %v757
      %924 = vmatprep.subr.mxu0 %v744
      %925 = vmatpush1.msra.mxu0 %v743
      %926 = vmatprep.subr.mxu0 %v746
      %927 = vmatpush1.msra.mxu0 %v745
      %928 = vmatprep.subr.mxu0 %v748
      %929 = vmatpush1.msra.mxu0 %v747
      %930 = vmatprep.subr.mxu0 %v750
      %931 = vmatpush1.msra.mxu0 %v749
      %932 = vmatprep.subr.mxu0 0.0
      %933 = vmatpush1.msra.mxu0 0.0
      %934 = vmatprep.subr.mxu0 0.0
      %935 = vmatpush1.msra.mxu0 0.0
      %936 = vmatprep.subr.mxu0 0.0
      %937 = vmatpush1.msra.mxu0 0.0
      %938 = vmatprep.subr.mxu0 0.0
      %939 = vmatpush1.msra.mxu0 0.0
      %940 = vmatprep.subr.mxu0 0.0
      %941 = vmatpush1.msra.mxu0 0.0
      %942 = vmatprep.subr.mxu0 0.0
      %943 = vmatpush1.msra.mxu0 0.0
      %944 = vmatprep.subr.mxu0 0.0
      %945 = vmatpush1.msra.mxu0 0.0
      %946 = vmatprep.subr.mxu0 0.0
      %947 = vmatpush1.msra.mxu0 0.0
      %948 = vmatprep.subr.mxu0 0.0
      %949 = vmatpush1.msra.mxu0 0.0
      %950 = vmatprep.subr.mxu0 0.0
      %951 = vmatpush1.msra.mxu0 0.0
      %952 = vmatprep.subr.mxu0 0.0
      %953 = vmatpush1.msra.mxu0 0.0
      %954 = vmatprep.subr.mxu0 0.0
      %955 = vmatpush1.msra.mxu0 0.0
      %956 = vmatprep.subr.mxu0 0.0
      %957 = vmatpush1.msra.mxu0 0.0
      %958 = vmatprep.subr.mxu0 0.0
      %959 = vmatpush1.msra.mxu0 0.0
      %960 = vmatprep.subr.mxu0 0.0
      %961 = vmatpush1.msra.mxu0 0.0
      %962 = vmatprep.subr.mxu0 0.0
      %963 = vmatpush1.msra.mxu0 0.0
      %964 = vmatprep.subr.mxu0 0.0
      %965 = vmatpush1.msra.mxu0 0.0
      %966 = vmatprep.subr.mxu0 0.0
      %967 = vmatpush1.msra.mxu0 0.0
      %968 = vmatprep.subr.mxu0 0.0
      %969 = vmatpush1.msra.mxu0 0.0
      %970 = vmatprep.subr.mxu0 0.0
      %971 = vmatpush1.msra.mxu0 0.0
      %972 = vmatprep.subr.mxu0 0.0
      %973 = vmatpush1.msra.mxu0 0.0
      %974 = vmatprep.subr.mxu0 0.0
      %975 = vmatpush1.msra.mxu0 0.0
      %976 = vmatprep.subr.mxu0 0.0
      %977 = vmatpush1.msra.mxu0 0.0
      %978 = vmatprep.subr.mxu0 0.0
      %979 = vmatpush1.msra.mxu0 0.0
      %980 = vmatprep.mubr.f32.mxu0 0.0
      %981 = vmatmul.mubr.f32.gmra.mrb[0].mxu0 %v905
      %v982 = vpop.f32.mrb[0].mxu0
      %v983 = vadd.f32 %v886, %v982
      %v984 = vpop.f32.mrb[0].mxu0
      %v985 = vadd.f32 %v886, %v984
      %986 = vmatprep.mubr.f32.mxu0 0.0
      %987 = vmatmul.mubr.f32.gmra.mrb[0].mxu0 %v908
      %v988 = vpop.f32.mrb[0].mxu0
      %v989 = vadd.f32 %v891, %v988
      %v990 = vpop.f32.mrb[0].mxu0
      %v991 = vadd.f32 %v891, %v990
      %992 = vmatprep.mubr.f32.mxu0 0.0
      %993 = vmatmul.mubr.f32.gmra.mrb[0].mxu0 %v911
      %v994 = vpop.f32.mrb[0].mxu0
      %v995 = vadd.f32 %v896, %v994
      %v996 = vpop.f32.mrb[0].mxu0
      %v997 = vadd.f32 %v896, %v996
      %998 = vmatprep.mubr.f32.mxu0 0.0
      %999 = vmatmul.mubr.f32.gmra.mrb[0].mxu0 %v914
      %v1000 = vpop.f32.mrb[0].mxu0
      %v1001 = vadd.f32 %v901, %v1000
      %v1002 = vpop.f32.mrb[0].mxu0
      %v1003 = vadd.f32 %v901, %v1002
      %1004 = vdwg.mxu0
      %v1005 = vmax.f32 %v983, 0.0
      %v1006 = vmax.f32 %v985, 0.0
      %v1007 = vmax.f32 %v989, 0.0
      %v1008 = vmax.f32 %v991, 0.0
      %v1009 = vmax.f32 %v995, 0.0
      %v1010 = vmax.f32 %v997, 0.0
      %v1011 = vmax.f32 %v1001, 0.0
      %v1012 = vmax.f32 %v1003, 0.0
      %v1013 = vadd.f32 %v1005, %v751
      %v1014 = vadd.f32 %v1006, %v752
      %v1015 = vadd.f32 %v1007, %v753
      %v1016 = vadd.f32 %v1008, %v754
      %v1017 = vadd.f32 %v1009, %v755
      %v1018 = vadd.f32 %v1010, %v756
      %v1019 = vadd.f32 %v1011, %v757
      %v1020 = vadd.f32 %v1012, %v758
      %v1021 = vld [vmem:[%s9] sm:$0xff]
      %v1022 = vld [vmem:[%s9 + $0x8] sm:$0xff]
      %v1023 = vld [vmem:[%s10] sm:$0xff]
      %v1024 = vld [vmem:[%s10 + $0x8] sm:$0xff]
      %1026 = vset.pattern.permute.xlu0 0
      %1027 = vperm.xlu0 %1026, %v1023
      %v1028 = vpop.permute.xlu0 %1027
      %1031 = vset.pattern.permute.xlu0 0
      %1032 = vperm.xlu0 %1031, %v1024
      %v1033 = vpop.permute.xlu0 %1032
      %v1036 = vsel %vm791, %v1021, 0
      %v1039 = vsel %vm791, %v1022, 0
      %1041 = vmatprep.subr.mxu0 %v1014
      %1042 = vmatpush1.msra.mxu0 %v1013
      %1043 = vmatprep.subr.mxu0 %v1016
      %1044 = vmatpush1.msra.mxu0 %v1015
      %1045 = vmatprep.subr.mxu0 %v1018
      %1046 = vmatpush1.msra.mxu0 %v1017
      %1047 = vmatprep.subr.mxu0 %v1020
      %1048 = vmatpush1.msra.mxu0 %v1019
      %1049 = vmatprep.subr.mxu0 0.0
      %1050 = vmatpush1.msra.mxu0 0.0
      %1051 = vmatprep.subr.mxu0 0.0
      %1052 = vmatpush1.msra.mxu0 0.0
      %1053 = vmatprep.subr.mxu0 0.0
      %1054 = vmatpush1.msra.mxu0 0.0
      %1055 = vmatprep.subr.mxu0 0.0
      %1056 = vmatpush1.msra.mxu0 0.0
      %1057 = vmatprep.subr.mxu0 0.0
      %1058 = vmatpush1.msra.mxu0 0.0
      %1059 = vmatprep.subr.mxu0 0.0
      %1060 = vmatpush1.msra.mxu0 0.0
      %1061 = vmatprep.subr.mxu0 0.0
      %1062 = vmatpush1.msra.mxu0 0.0
      %1063 = vmatprep.subr.mxu0 0.0
      %1064 = vmatpush1.msra.mxu0 0.0
      %1065 = vmatprep.subr.mxu0 0.0
      %1066 = vmatpush1.msra.mxu0 0.0
      %1067 = vmatprep.subr.mxu0 0.0
      %1068 = vmatpush1.msra.mxu0 0.0
      %1069 = vmatprep.subr.mxu0 0.0
      %1070 = vmatpush1.msra.mxu0 0.0
      %1071 = vmatprep.subr.mxu0 0.0
      %1072 = vmatpush1.msra.mxu0 0.0
      %1073 = vmatprep.subr.mxu0 0.0
      %1074 = vmatpush1.msra.mxu0 0.0
      %1075 = vmatprep.subr.mxu0 0.0
      %1076 = vmatpush1.msra.mxu0 0.0
      %1077 = vmatprep.subr.mxu0 0.0
      %1078 = vmatpush1.msra.mxu0 0.0
      %1079 = vmatprep.subr.mxu0 0.0
      %1080 = vmatpush1.msra.mxu0 0.0
      %1081 = vmatprep.subr.mxu0 0.0
      %1082 = vmatpush1.msra.mxu0 0.0
      %1083 = vmatprep.subr.mxu0 0.0
      %1084 = vmatpush1.msra.mxu0 0.0
      %1085 = vmatprep.subr.mxu0 0.0
      %1086 = vmatpush1.msra.mxu0 0.0
      %1087 = vmatprep.subr.mxu0 0.0
      %1088 = vmatpush1.msra.mxu0 0.0
      %1089 = vmatprep.subr.mxu0 0.0
      %1090 = vmatpush1.msra.mxu0 0.0
      %1091 = vmatprep.subr.mxu0 0.0
      %1092 = vmatpush1.msra.mxu0 0.0
      %1093 = vmatprep.subr.mxu0 0.0
      %1094 = vmatpush1.msra.mxu0 0.0
      %1095 = vmatprep.subr.mxu0 0.0
      %1096 = vmatpush1.msra.mxu0 0.0
      %1097 = vmatprep.subr.mxu0 0.0
      %1098 = vmatpush1.msra.mxu0 0.0
      %1099 = vmatprep.subr.mxu0 0.0
      %1100 = vmatpush1.msra.mxu0 0.0
      %1101 = vmatprep.subr.mxu0 0.0
      %1102 = vmatpush1.msra.mxu0 0.0
      %1103 = vmatprep.subr.mxu0 0.0
      %1104 = vmatpush1.msra.mxu0 0.0
      %1105 = vmatprep.mubr.f32.mxu0 0.0
      %1106 = vmatmul.mubr.f32.gmra.mrb[0].mxu0 %v1036
      %v1107 = vpop.f32.mrb[0].mxu0
      %v1108 = vadd.f32 %v1028, %v1107
      %v1109 = vpop.f32.mrb[0].mxu0
      %v1110 = vadd.f32 %v1028, %v1109
      %1111 = vmatprep.mubr.f32.mxu0 0.0
      %1112 = vmatmul.mubr.f32.gmra.mrb[0].mxu0 %v1039
      %v1113 = vpop.f32.mrb[0].mxu0
      %v1114 = vadd.f32 %v1033, %v1113
      %v1115 = vpop.f32.mrb[0].mxu0
      %v1116 = vadd.f32 %v1033, %v1115
      %1117 = vdwg.mxu0
      %v1118 = vmul.f32 %v1114, 0.5
      %v1119 = vmul.f32 %v1116, 0.5
      %v1120 = vmul.f32 %v1118, 1.442695
      %v1121 = vpow.pop %v1120
      %v1122 = vmul.f32 %v1119, 1.442695
      %v1123 = vpow.pop %v1122
      %v1124 = vmul.f32 %v1121, %v775
      %v1125 = vmul.f32 %v1123, %v776
      %v1126 = vadd.f32 %v1108, %v1124
      %v1127 = vadd.f32 %v1110, %v1125
      %v1128 = vsub.f32 %v1126, %v865
      %v1129 = vsub.f32 %v1127, %v867
      %v1130 = vsub.f32 %v871, %v1114
      %v1131 = vsub.f32 %v873, %v1116
      %v1132 = vmul.f32 %v1128, %v1128
      %v1133 = vmul.f32 %v1129, %v1129
      %v1134 = vsub.f32 0.0, %v871
      %v1135 = vsub.f32 0.0, %v873
      %v1136 = vmul.f32 %v1134, 1.442695
      %v1137 = vpow.pop %v1136
      %v1138 = vmul.f32 %v1135, 1.442695
      %v1139 = vpow.pop %v1138
      %v1140 = vmul.f32 %v1132, %v1137
      %v1141 = vmul.f32 %v1133, %v1139
      %v1142 = vadd.f32 %v1130, %v1140
      %v1143 = vadd.f32 %v1131, %v1141
      %v1144 = vmul.f32 %v775, %v775
      %v1145 = vmul.f32 %v776, %v776
      %v1146 = vsub.f32 %v1142, %v1144
      %v1147 = vsub.f32 %v1143, %v1145
      %v1148 = vmul.f32 %v1146, 0.5
      %v1149 = vmul.f32 %v1147, 0.5
      %v1150 = vadd.f32 %v1148, %v1149
      %1151 = vadd.xlane.f32.xlu0 %v1150
      %v1152 = vpop.xlane.xlu0 %1151
      %v1153 = vrot.slane %v1152, 4
      %v1154 = vadd.f32 %v1152, %v1153
      %v1155 = vrot.slane %v1154, 2
      %v1156 = vadd.f32 %v1154, %v1155
      %v1157 = vrot.slane %v1156, 1
      %v1158 = vadd.f32 %v1156, %v1157
      %vm1159 = vcmask 0
      %1160 = vst.msk [vmem:[%s742] sm:$0x1] %vm1159, %v1158
      %v1161 = vld [vmem:[%s11] sm:$0xff]
      %v1162 = vld [vmem:[%s11 + $0x8] sm:$0xff]
      %v1163 = vld [vmem:[%s11 + $0x10] sm:$0xff]
      %v1164 = vld [vmem:[%s11 + $0x18] sm:$0xff]
      %v1165 = vld [vmem:[%s12] sm:$0xff]
      %v1166 = vld [vmem:[%s12 + $0x8] sm:$0xff]
      %v1167 = vld [vmem:[%s12 + $0x10] sm:$0xff]
      %v1168 = vld [vmem:[%s12 + $0x18] sm:$0xff]
      %1170 = vset.pattern.permute.xlu0 0
      %1171 = vperm.xlu0 %1170, %v1165
      %v1172 = vpop.permute.xlu0 %1171
      %1175 = vset.pattern.permute.xlu0 0
      %1176 = vperm.xlu0 %1175, %v1166
      %v1177 = vpop.permute.xlu0 %1176
      %1180 = vset.pattern.permute.xlu0 0
      %1181 = vperm.xlu0 %1180, %v1167
      %v1182 = vpop.permute.xlu0 %1181
      %1185 = vset.pattern.permute.xlu0 0
      %1186 = vperm.xlu0 %1185, %v1168
      %v1187 = vpop.permute.xlu0 %1186
      %vm1189 = vcmask 64512
      %v1191 = vsel %vm1189, %v1161, 0
      %v1194 = vsel %vm1189, %v1162, 0
      %v1197 = vsel %vm1189, %v1163, 0
      %v1200 = vsel %vm1189, %v1164, 0
      %1202 = vmatprep.subr.mxu0 %v1127
      %1203 = vmatpush1.msra.mxu0 %v1126
      %1204 = vmatprep.subr.mxu0 0.0
      %1205 = vmatpush1.msra.mxu0 0.0
      %1206 = vmatprep.subr.mxu0 0.0
      %1207 = vmatpush1.msra.mxu0 0.0
      %1208 = vmatprep.subr.mxu0 0.0
      %1209 = vmatpush1.msra.mxu0 0.0
      %1210 = vmatprep.subr.mxu0 0.0
      %1211 = vmatpush1.msra.mxu0 0.0
      %1212 = vmatprep.subr.mxu0 0.0
      %1213 = vmatpush1.msra.mxu0 0.0
      %1214 = vmatprep.subr.mxu0 0.0
      %1215 = vmatpush1.msra.mxu0 0.0
      %1216 = vmatprep.subr.mxu0 0.0
      %1217 = vmatpush1.msra.mxu0 0.0
      %1218 = vmatprep.subr.mxu0 0.0
      %1219 = vmatpush1.msra.mxu0 0.0
      %1220 = vmatprep.subr.mxu0 0.0
      %1221 = vmatpush1.msra.mxu0 0.0
      %1222 = vmatprep.subr.mxu0 0.0
      %1223 = vmatpush1.msra.mxu0 0.0
      %1224 = vmatprep.subr.mxu0 0.0
      %1225 = vmatpush1.msra.mxu0 0.0
      %1226 = vmatprep.subr.mxu0 0.0
      %1227 = vmatpush1.msra.mxu0 0.0
      %1228 = vmatprep.subr.mxu0 0.0
      %1229 = vmatpush1.msra.mxu0 0.0
      %1230 = vmatprep.subr.mxu0 0.0
      %1231 = vmatpush1.msra.mxu0 0.0
      %1232 = vmatprep.subr.mxu0 0.0
      %1233 = vmatpush1.msra.mxu0 0.0
      %1234 = vmatprep.subr.mxu0 0.0
      %1235 = vmatpush1.msra.mxu0 0.0
      %1236 = vmatprep.subr.mxu0 0.0
      %1237 = vmatpush1.msra.mxu0 0.0
      %1238 = vmatprep.subr.mxu0 0.0
      %1239 = vmatpush1.msra.mxu0 0.0
      %1240 = vmatprep.subr.mxu0 0.0
      %1241 = vmatpush1.msra.mxu0 0.0
      %1242 = vmatprep.subr.mxu0 0.0
      %1243 = vmatpush1.msra.mxu0 0.0
      %1244 = vmatprep.subr.mxu0 0.0
      %1245 = vmatpush1.msra.mxu0 0.0
      %1246 = vmatprep.subr.mxu0 0.0
      %1247 = vmatpush1.msra.mxu0 0.0
      %1248 = vmatprep.subr.mxu0 0.0
      %1249 = vmatpush1.msra.mxu0 0.0
      %1250 = vmatprep.subr.mxu0 0.0
      %1251 = vmatpush1.msra.mxu0 0.0
      %1252 = vmatprep.subr.mxu0 0.0
      %1253 = vmatpush1.msra.mxu0 0.0
      %1254 = vmatprep.subr.mxu0 0.0
      %1255 = vmatpush1.msra.mxu0 0.0
      %1256 = vmatprep.subr.mxu0 0.0
      %1257 = vmatpush1.msra.mxu0 0.0
      %1258 = vmatprep.subr.mxu0 0.0
      %1259 = vmatpush1.msra.mxu0 0.0
      %1260 = vmatprep.subr.mxu0 0.0
      %1261 = vmatpush1.msra.mxu0 0.0
      %1262 = vmatprep.subr.mxu0 0.0
      %1263 = vmatpush1.msra.mxu0 0.0
      %1264 = vmatprep.subr.mxu0 0.0
      %1265 = vmatpush1.msra.mxu0 0.0
      %1266 = vmatprep.mubr.f32.mxu0 0.0
      %1267 = vmatmul.mubr.f32.gmra.mrb[0].mxu0 %v1191
      %v1268 = vpop.f32.mrb[0].mxu0
      %v1269 = vadd.f32 %v1172, %v1268
      %v1270 = vpop.f32.mrb[0].mxu0
      %v1271 = vadd.f32 %v1172, %v1270
      %1272 = vmatprep.mubr.f32.mxu0 0.0
      %1273 = vmatmul.mubr.f32.gmra.mrb[0].mxu0 %v1194
      %v1274 = vpop.f32.mrb[0].mxu0
      %v1275 = vadd.f32 %v1177, %v1274
      %v1276 = vpop.f32.mrb[0].mxu0
      %v1277 = vadd.f32 %v1177, %v1276
      %1278 = vmatprep.mubr.f32.mxu0 0.0
      %1279 = vmatmul.mubr.f32.gmra.mrb[0].mxu0 %v1197
      %v1280 = vpop.f32.mrb[0].mxu0
      %v1281 = vadd.f32 %v1182, %v1280
      %v1282 = vpop.f32.mrb[0].mxu0
      %v1283 = vadd.f32 %v1182, %v1282
      %1284 = vmatprep.mubr.f32.mxu0 0.0
      %1285 = vmatmul.mubr.f32.gmra.mrb[0].mxu0 %v1200
      %v1286 = vpop.f32.mrb[0].mxu0
      %v1287 = vadd.f32 %v1187, %v1286
      %v1288 = vpop.f32.mrb[0].mxu0
      %v1289 = vadd.f32 %v1187, %v1288
      %1290 = vdwg.mxu0
      %v1291 = vld [vmem:[%s13] sm:$0xff]
      %v1292 = vld [vmem:[%s13 + $0x8] sm:$0xff]
      %v1293 = vld [vmem:[%s13 + $0x10] sm:$0xff]
      %v1294 = vld [vmem:[%s13 + $0x18] sm:$0xff]
      %v1295 = vld [vmem:[%s14] sm:$0xff]
      %v1296 = vld [vmem:[%s14 + $0x8] sm:$0xff]
      %v1297 = vld [vmem:[%s14 + $0x10] sm:$0xff]
      %v1298 = vld [vmem:[%s14 + $0x18] sm:$0xff]
      %1300 = vset.pattern.permute.xlu0 0
      %1301 = vperm.xlu0 %1300, %v1295
      %v1302 = vpop.permute.xlu0 %1301
      %1305 = vset.pattern.permute.xlu0 0
      %1306 = vperm.xlu0 %1305, %v1296
      %v1307 = vpop.permute.xlu0 %1306
      %1310 = vset.pattern.permute.xlu0 0
      %1311 = vperm.xlu0 %1310, %v1297
      %v1312 = vpop.permute.xlu0 %1311
      %1315 = vset.pattern.permute.xlu0 0
      %1316 = vperm.xlu0 %1315, %v1298
      %v1317 = vpop.permute.xlu0 %1316
      %v1320 = vsel %vm903, %v1291, 0
      %v1323 = vsel %vm903, %v1292, 0
      %v1326 = vsel %vm903, %v1293, 0
      %v1329 = vsel %vm903, %v1294, 0
      %1331 = vmatprep.subr.mxu0 %v1271
      %1332 = vmatpush1.msra.mxu0 %v1269
      %1333 = vmatprep.subr.mxu0 %v1277
      %1334 = vmatpush1.msra.mxu0 %v1275
      %1335 = vmatprep.subr.mxu0 %v1283
      %1336 = vmatpush1.msra.mxu0 %v1281
      %1337 = vmatprep.subr.mxu0 %v1289
      %1338 = vmatpush1.msra.mxu0 %v1287
      %1339 = vmatprep.subr.mxu0 %v760
      %1340 = vmatpush1.msra.mxu0 %v759
      %1341 = vmatprep.subr.mxu0 %v762
      %1342 = vmatpush1.msra.mxu0 %v761
      %1343 = vmatprep.subr.mxu0 %v764
      %1344 = vmatpush1.msra.mxu0 %v763
      %1345 = vmatprep.subr.mxu0 %v766
      %1346 = vmatpush1.msra.mxu0 %v765
      %1347 = vmatprep.subr.mxu0 0.0
      %1348 = vmatpush1.msra.mxu0 0.0
      %1349 = vmatprep.subr.mxu0 0.0
      %1350 = vmatpush1.msra.mxu0 0.0
      %1351 = vmatprep.subr.mxu0 0.0
      %1352 = vmatpush1.msra.mxu0 0.0
      %1353 = vmatprep.subr.mxu0 0.0
      %1354 = vmatpush1.msra.mxu0 0.0
      %1355 = vmatprep.subr.mxu0 0.0
      %1356 = vmatpush1.msra.mxu0 0.0
      %1357 = vmatprep.subr.mxu0 0.0
      %1358 = vmatpush1.msra.mxu0 0.0
      %1359 = vmatprep.subr.mxu0 0.0
      %1360 = vmatpush1.msra.mxu0 0.0
      %1361 = vmatprep.subr.mxu0 0.0
      %1362 = vmatpush1.msra.mxu0 0.0
      %1363 = vmatprep.subr.mxu0 0.0
      %1364 = vmatpush1.msra.mxu0 0.0
      %1365 = vmatprep.subr.mxu0 0.0
      %1366 = vmatpush1.msra.mxu0 0.0
      %1367 = vmatprep.subr.mxu0 0.0
      %1368 = vmatpush1.msra.mxu0 0.0
      %1369 = vmatprep.subr.mxu0 0.0
      %1370 = vmatpush1.msra.mxu0 0.0
      %1371 = vmatprep.subr.mxu0 0.0
      %1372 = vmatpush1.msra.mxu0 0.0
      %1373 = vmatprep.subr.mxu0 0.0
      %1374 = vmatpush1.msra.mxu0 0.0
      %1375 = vmatprep.subr.mxu0 0.0
      %1376 = vmatpush1.msra.mxu0 0.0
      %1377 = vmatprep.subr.mxu0 0.0
      %1378 = vmatpush1.msra.mxu0 0.0
      %1379 = vmatprep.subr.mxu0 0.0
      %1380 = vmatpush1.msra.mxu0 0.0
      %1381 = vmatprep.subr.mxu0 0.0
      %1382 = vmatpush1.msra.mxu0 0.0
      %1383 = vmatprep.subr.mxu0 0.0
      %1384 = vmatpush1.msra.mxu0 0.0
      %1385 = vmatprep.subr.mxu0 0.0
      %1386 = vmatpush1.msra.mxu0 0.0
      %1387 = vmatprep.subr.mxu0 0.0
      %1388 = vmatpush1.msra.mxu0 0.0
      %1389 = vmatprep.subr.mxu0 0.0
      %1390 = vmatpush1.msra.mxu0 0.0
      %1391 = vmatprep.subr.mxu0 0.0
      %1392 = vmatpush1.msra.mxu0 0.0
      %1393 = vmatprep.subr.mxu0 0.0
      %1394 = vmatpush1.msra.mxu0 0.0
      %1395 = vmatprep.mubr.f32.mxu0 0.0
      %1396 = vmatmul.mubr.f32.gmra.mrb[0].mxu0 %v1320
      %v1397 = vpop.f32.mrb[0].mxu0
      %v1398 = vadd.f32 %v1302, %v1397
      %v1399 = vpop.f32.mrb[0].mxu0
      %v1400 = vadd.f32 %v1302, %v1399
      %1401 = vmatprep.mubr.f32.mxu0 0.0
      %1402 = vmatmul.mubr.f32.gmra.mrb[0].mxu0 %v1323
      %v1403 = vpop.f32.mrb[0].mxu0
      %v1404 = vadd.f32 %v1307, %v1403
      %v1405 = vpop.f32.mrb[0].mxu0
      %v1406 = vadd.f32 %v1307, %v1405
      %1407 = vmatprep.mubr.f32.mxu0 0.0
      %1408 = vmatmul.mubr.f32.gmra.mrb[0].mxu0 %v1326
      %v1409 = vpop.f32.mrb[0].mxu0
      %v1410 = vadd.f32 %v1312, %v1409
      %v1411 = vpop.f32.mrb[0].mxu0
      %v1412 = vadd.f32 %v1312, %v1411
      %1413 = vmatprep.mubr.f32.mxu0 0.0
      %1414 = vmatmul.mubr.f32.gmra.mrb[0].mxu0 %v1329
      %v1415 = vpop.f32.mrb[0].mxu0
      %v1416 = vadd.f32 %v1317, %v1415
      %v1417 = vpop.f32.mrb[0].mxu0
      %v1418 = vadd.f32 %v1317, %v1417
      %1419 = vdwg.mxu0
      %v1420 = vmax.f32 %v1398, 0.0
      %v1421 = vmax.f32 %v1400, 0.0
      %v1422 = vmax.f32 %v1404, 0.0
      %v1423 = vmax.f32 %v1406, 0.0
      %v1424 = vmax.f32 %v1410, 0.0
      %v1425 = vmax.f32 %v1412, 0.0
      %v1426 = vmax.f32 %v1416, 0.0
      %v1427 = vmax.f32 %v1418, 0.0
      %v1428 = vld [vmem:[%s15] sm:$0xff]
      %v1429 = vld [vmem:[%s15 + $0x8] sm:$0xff]
      %v1430 = vld [vmem:[%s15 + $0x10] sm:$0xff]
      %v1431 = vld [vmem:[%s15 + $0x18] sm:$0xff]
      %v1432 = vld [vmem:[%s16] sm:$0xff]
      %v1433 = vld [vmem:[%s16 + $0x8] sm:$0xff]
      %v1434 = vld [vmem:[%s16 + $0x10] sm:$0xff]
      %v1435 = vld [vmem:[%s16 + $0x18] sm:$0xff]
      %1437 = vset.pattern.permute.xlu0 0
      %1438 = vperm.xlu0 %1437, %v1432
      %v1439 = vpop.permute.xlu0 %1438
      %1442 = vset.pattern.permute.xlu0 0
      %1443 = vperm.xlu0 %1442, %v1433
      %v1444 = vpop.permute.xlu0 %1443
      %1447 = vset.pattern.permute.xlu0 0
      %1448 = vperm.xlu0 %1447, %v1434
      %v1449 = vpop.permute.xlu0 %1448
      %1452 = vset.pattern.permute.xlu0 0
      %1453 = vperm.xlu0 %1452, %v1435
      %v1454 = vpop.permute.xlu0 %1453
      %v1457 = vsel %vm903, %v1428, 0
      %v1460 = vsel %vm903, %v1429, 0
      %v1463 = vsel %vm903, %v1430, 0
      %v1466 = vsel %vm903, %v1431, 0
      %1468 = vmatprep.subr.mxu0 %v1421
      %1469 = vmatpush1.msra.mxu0 %v1420
      %1470 = vmatprep.subr.mxu0 %v1423
      %1471 = vmatpush1.msra.mxu0 %v1422
      %1472 = vmatprep.subr.mxu0 %v1425
      %1473 = vmatpush1.msra.mxu0 %v1424
      %1474 = vmatprep.subr.mxu0 %v1427
      %1475 = vmatpush1.msra.mxu0 %v1426
      %1476 = vmatprep.subr.mxu0 %v768
      %1477 = vmatpush1.msra.mxu0 %v767
      %1478 = vmatprep.subr.mxu0 %v770
      %1479 = vmatpush1.msra.mxu0 %v769
      %1480 = vmatprep.subr.mxu0 %v772
      %1481 = vmatpush1.msra.mxu0 %v771
      %1482 = vmatprep.subr.mxu0 %v774
      %1483 = vmatpush1.msra.mxu0 %v773
      %1484 = vmatprep.subr.mxu0 0.0
      %1485 = vmatpush1.msra.mxu0 0.0
      %1486 = vmatprep.subr.mxu0 0.0
      %1487 = vmatpush1.msra.mxu0 0.0
      %1488 = vmatprep.subr.mxu0 0.0
      %1489 = vmatpush1.msra.mxu0 0.0
      %1490 = vmatprep.subr.mxu0 0.0
      %1491 = vmatpush1.msra.mxu0 0.0
      %1492 = vmatprep.subr.mxu0 0.0
      %1493 = vmatpush1.msra.mxu0 0.0
      %1494 = vmatprep.subr.mxu0 0.0
      %1495 = vmatpush1.msra.mxu0 0.0
      %1496 = vmatprep.subr.mxu0 0.0
      %1497 = vmatpush1.msra.mxu0 0.0
      %1498 = vmatprep.subr.mxu0 0.0
      %1499 = vmatpush1.msra.mxu0 0.0
      %1500 = vmatprep.subr.mxu0 0.0
      %1501 = vmatpush1.msra.mxu0 0.0
      %1502 = vmatprep.subr.mxu0 0.0
      %1503 = vmatpush1.msra.mxu0 0.0
      %1504 = vmatprep.subr.mxu0 0.0
      %1505 = vmatpush1.msra.mxu0 0.0
      %1506 = vmatprep.subr.mxu0 0.0
      %1507 = vmatpush1.msra.mxu0 0.0
      %1508 = vmatprep.subr.mxu0 0.0
      %1509 = vmatpush1.msra.mxu0 0.0
      %1510 = vmatprep.subr.mxu0 0.0
      %1511 = vmatpush1.msra.mxu0 0.0
      %1512 = vmatprep.subr.mxu0 0.0
      %1513 = vmatpush1.msra.mxu0 0.0
      %1514 = vmatprep.subr.mxu0 0.0
      %1515 = vmatpush1.msra.mxu0 0.0
      %1516 = vmatprep.subr.mxu0 0.0
      %1517 = vmatpush1.msra.mxu0 0.0
      %1518 = vmatprep.subr.mxu0 0.0
      %1519 = vmatpush1.msra.mxu0 0.0
      %1520 = vmatprep.subr.mxu0 0.0
      %1521 = vmatpush1.msra.mxu0 0.0
      %1522 = vmatprep.subr.mxu0 0.0
      %1523 = vmatpush1.msra.mxu0 0.0
      %1524 = vmatprep.subr.mxu0 0.0
      %1525 = vmatpush1.msra.mxu0 0.0
      %1526 = vmatprep.subr.mxu0 0.0
      %1527 = vmatpush1.msra.mxu0 0.0
      %1528 = vmatprep.subr.mxu0 0.0
      %1529 = vmatpush1.msra.mxu0 0.0
      %1530 = vmatprep.subr.mxu0 0.0
      %1531 = vmatpush1.msra.mxu0 0.0
      %1532 = vmatprep.mubr.f32.mxu0 0.0
      %1533 = vmatmul.mubr.f32.gmra.mrb[0].mxu0 %v1457
      %v1534 = vpop.f32.mrb[0].mxu0
      %v1535 = vadd.f32 %v1439, %v1534
      %v1536 = vpop.f32.mrb[0].mxu0
      %v1537 = vadd.f32 %v1439, %v1536
      %1538 = vmatprep.mubr.f32.mxu0 0.0
      %1539 = vmatmul.mubr.f32.gmra.mrb[0].mxu0 %v1460
      %v1540 = vpop.f32.mrb[0].mxu0
      %v1541 = vadd.f32 %v1444, %v1540
      %v1542 = vpop.f32.mrb[0].mxu0
      %v1543 = vadd.f32 %v1444, %v1542
      %1544 = vmatprep.mubr.f32.mxu0 0.0
      %1545 = vmatmul.mubr.f32.gmra.mrb[0].mxu0 %v1463
      %v1546 = vpop.f32.mrb[0].mxu0
      %v1547 = vadd.f32 %v1449, %v1546
      %v1548 = vpop.f32.mrb[0].mxu0
      %v1549 = vadd.f32 %v1449, %v1548
      %1550 = vmatprep.mubr.f32.mxu0 0.0
      %1551 = vmatmul.mubr.f32.gmra.mrb[0].mxu0 %v1466
      %v1552 = vpop.f32.mrb[0].mxu0
      %v1553 = vadd.f32 %v1454, %v1552
      %v1554 = vpop.f32.mrb[0].mxu0
      %v1555 = vadd.f32 %v1454, %v1554
      %1556 = vdwg.mxu0
      %v1557 = vmax.f32 %v1535, 0.0
      %v1558 = vmax.f32 %v1537, 0.0
      %v1559 = vmax.f32 %v1541, 0.0
      %v1560 = vmax.f32 %v1543, 0.0
      %v1561 = vmax.f32 %v1547, 0.0
      %v1562 = vmax.f32 %v1549, 0.0
      %v1563 = vmax.f32 %v1553, 0.0
      %v1564 = vmax.f32 %v1555, 0.0
      %v1565 = vadd.f32 %v1557, %v1420
      %v1566 = vadd.f32 %v1558, %v1421
      %v1567 = vadd.f32 %v1559, %v1422
      %v1568 = vadd.f32 %v1560, %v1423
      %v1569 = vadd.f32 %v1561, %v1424
      %v1570 = vadd.f32 %v1562, %v1425
      %v1571 = vadd.f32 %v1563, %v1426
      %v1572 = vadd.f32 %v1564, %v1427
      %1573 = vst [vmem:[%s729] sm:$0xff] %v1420
      %1574 = vst [vmem:[%s729 + $0x8] sm:$0xff] %v1421
      %1575 = vst [vmem:[%s729 + $0x10] sm:$0xff] %v1422
      %1576 = vst [vmem:[%s729 + $0x18] sm:$0xff] %v1423
      %1577 = vst [vmem:[%s729 + $0x20] sm:$0xff] %v1424
      %1578 = vst [vmem:[%s729 + $0x28] sm:$0xff] %v1425
      %1579 = vst [vmem:[%s729 + $0x30] sm:$0xff] %v1426
      %1580 = vst [vmem:[%s729 + $0x38] sm:$0xff] %v1427
      %1581 = vst [vmem:[%s734] sm:$0xff] %v1565
      %1582 = vst [vmem:[%s734 + $0x8] sm:$0xff] %v1566
      %1583 = vst [vmem:[%s734 + $0x10] sm:$0xff] %v1567
      %1584 = vst [vmem:[%s734 + $0x18] sm:$0xff] %v1568
      %1585 = vst [vmem:[%s734 + $0x20] sm:$0xff] %v1569
      %1586 = vst [vmem:[%s734 + $0x28] sm:$0xff] %v1570
      %1587 = vst [vmem:[%s734 + $0x30] sm:$0xff] %v1571
      %1588 = vst [vmem:[%s734 + $0x38] sm:$0xff] %v1572
      %1589 = vst [vmem:[%s739] sm:$0xff] %v1126
      %1590 = vst [vmem:[%s739 + $0x8] sm:$0xff] %v1127
      %p1591 = scmp.lt.s32.totalorder %s32, 1
      %s1592 = scalar_select %p1591, %s32, 1
      %s1593 = smul.addr %s1592, 8
      %s1594 = smul.addr %s1593, 8
      %s1595 = scalar_lea.vmem %s17, %s1594
      %p1596 = scmp.lt.s32.totalorder %s32, 1
      %s1597 = scalar_select %p1596, %s32, 1
      %s1598 = smul.addr %s1597, 8
      %s1599 = smul.addr %s1598, 8
      %s1600 = scalar_lea.vmem %s18, %s1599
      %p1601 = scmp.lt.s32.totalorder %s32, 1
      %s1602 = scalar_select %p1601, %s32, 1
      %s1603 = smul.addr %s1602, 2
      %s1604 = smul.addr %s1603, 8
      %s1605 = scalar_lea.vmem %s19, %s1604
      %p1606 = scmp.lt.s32.totalorder %s32, 1
      %s1607 = scalar_select %p1606, %s32, 1
      %s1608 = scalar_lea.vmem %s20, %s1607
      // Predicated region
      $region89: #{lvae_stage_forward.1} parent=87 // pred_check
        %p1609 = pneg %p432
      $region90: #{lvae_stage_forward.1} parent=87 // pred_check_branch
        %1611 = sbr.rel (%p1609) target = $region92
      $region91: #{lvae_stage_forward.1} parent=87 // pred_region
        _
      $region92: #{lvae_stage_forward.1} parent=87 // pred_fallthru
        _
      // Predicated region
      $region93: #{lvae_stage_forward.1} parent=87 // pred_check
        %p1612 = pneg %p458
      $region94: #{lvae_stage_forward.1} parent=87 // pred_check_branch
        %1614 = sbr.rel (%p1612) target = $region96
      $region95: #{lvae_stage_forward.1} parent=87 // pred_region
        _
      $region96: #{lvae_stage_forward.1} parent=87 // pred_fallthru
        _
      // Predicated region
      $region97: #{lvae_stage_forward.1} parent=87 // pred_check
        %p1615 = pneg %p484
      $region98: #{lvae_stage_forward.1} parent=87 // pred_check_branch
        %1617 = sbr.rel (%p1615) target = $region100
      $region99: #{lvae_stage_forward.1} parent=87 // pred_region
        _
      $region100: #{lvae_stage_forward.1} parent=87 // pred_fallthru
        _
      // Predicated region
      $region101: #{lvae_stage_forward.1} parent=87 // pred_check
        %p1618 = pneg %p510
      $region102: #{lvae_stage_forward.1} parent=87 // pred_check_branch
        %1620 = sbr.rel (%p1618) target = $region104
      $region103: #{lvae_stage_forward.1} parent=87 // pred_region
        _
      $region104: #{lvae_stage_forward.1} parent=87 // pred_fallthru
        _
    $region88: #{lvae_stage_forward.1} parent=5 // pred_fallthru
      _
    %p1621 = scmp.le.s32.totalorder 2, %s27
    // Predicated region
    $region105: #{lvae_stage_forward.1} parent=5 // pred_check
      %p1622 = pneg %p1621
    $region106: #{lvae_stage_forward.1} parent=5 // pred_check_branch
      %1624 = sbr.rel (%p1622) target = $region108
    $region107: #{lvae_stage_forward.1} parent=5 // pred_region
      %s1625 = ssub.s32 %s27, 2
      // Predicated region
      $region109: #{lvae_stage_forward.1} parent=107 // pred_check
        %p1626 = pneg %p438
      $region110: #{lvae_stage_forward.1} parent=107 // pred_check_branch
        %1628 = sbr.rel (%p1626) target = $region112
      $region111: #{lvae_stage_forward.1} parent=107 // pred_region
        %p1629 = scmp.lt.s32.totalorder %s33, 1
        %s1630 = scalar_select %p1629, %s33, 1
        %s1631 = smul.addr %s1630, 8
        %s1632 = smul.addr %s1631, 8
        %s1633 = scalar_lea.vmem %s17, %s1632
      $region112: #{lvae_stage_forward.1} parent=107 // pred_fallthru
        _
      // Predicated region
      $region113: #{lvae_stage_forward.1} parent=107 // pred_check
        %p1634 = pneg %p464
      $region114: #{lvae_stage_forward.1} parent=107 // pred_check_branch
        %1636 = sbr.rel (%p1634) target = $region116
      $region115: #{lvae_stage_forward.1} parent=107 // pred_region
        %p1637 = scmp.lt.s32.totalorder %s33, 1
        %s1638 = scalar_select %p1637, %s33, 1
        %s1639 = smul.addr %s1638, 8
        %s1640 = smul.addr %s1639, 8
        %s1641 = scalar_lea.vmem %s18, %s1640
      $region116: #{lvae_stage_forward.1} parent=107 // pred_fallthru
        _
      // Predicated region
      $region117: #{lvae_stage_forward.1} parent=107 // pred_check
        %p1642 = pneg %p490
      $region118: #{lvae_stage_forward.1} parent=107 // pred_check_branch
        %1644 = sbr.rel (%p1642) target = $region120
      $region119: #{lvae_stage_forward.1} parent=107 // pred_region
        %p1645 = scmp.lt.s32.totalorder %s33, 1
        %s1646 = scalar_select %p1645, %s33, 1
        %s1647 = smul.addr %s1646, 2
        %s1648 = smul.addr %s1647, 8
        %s1649 = scalar_lea.vmem %s19, %s1648
      $region120: #{lvae_stage_forward.1} parent=107 // pred_fallthru
        _
      // Predicated region
      $region121: #{lvae_stage_forward.1} parent=107 // pred_check
        %p1650 = pneg %p516
      $region122: #{lvae_stage_forward.1} parent=107 // pred_check_branch
        %1652 = sbr.rel (%p1650) target = $region124
      $region123: #{lvae_stage_forward.1} parent=107 // pred_region
        %p1653 = scmp.lt.s32.totalorder %s33, 1
        %s1654 = scalar_select %p1653, %s33, 1
        %s1655 = scalar_lea.vmem %s20, %s1654
      $region124: #{lvae_stage_forward.1} parent=107 // pred_fallthru
        _
    $region108: #{lvae_stage_forward.1} parent=5 // pred_fallthru
      _
  $region6: #{lvae_stage_forward.1} parent=0 // loop_footer
    %s31 = sadd.s32 1, %s27
  $region7: #{lvae_stage_forward.1} parent=0 // loop_footer_branch
    %26 = sbr.rel target = $region3
  $region8: #{lvae_stage_forward.1} parent=0 // loop_exit
    _

</llo_original>
